<compile_context>
chip_gen: v5e
topology: v5e:2x2
jax: 0.10.0
libtpu: 0.0.40
codegen_flags: <defaults>
</compile_context>

<pallas_src>
import jax
import jax.numpy as jnp
from jax import lax
from jax.experimental import pallas as pl
from jax.experimental.pallas import tpu as pltpu


LPAD = 16  # left zero-halo width in the conv2 scratch; multiple of the bf16
           # sublane tile (16) so the interior h1 store is unmasked/aligned.


def _dummy_model_kernel(x_ref, w1_ref, b1_ref, w2_ref, b2_ref, w3_ref, b3_ref,
                        logits_ref, pad_ref):
    # x_ref:      (1, 1, Hb+4, W+2, Cin) bf16 plain padded input band
    #                                    (2-row / 1-col halo, no im2col)
    # w1_ref:     (9*Cin, C1)  bf16 fused conv1 weights, row = (dy*3+dx)*Cin+ci
    # w2_ref:     (9, C1, C1)  bf16 conv2 taps, t = dy*3 + dx
    # w3_ref:     (NC, C1)     bf16 1x1 conv3 (transposed -> lane-dense output)
    # b1/b2_ref:  (1, C1) f32;  b3_ref: (NC, 1) f32
    # logits_ref: (1, 1, NC, Hb*W) f32, lane-dense logits for this (batch, band)
    # pad_ref:    (Hb+2, W+2*LPAD, C1) bf16 scratch: conv1 output + conv2 halo
    Hb = x_ref.shape[2] - 4
    W = x_ref.shape[3] - 2
    cin = x_ref.shape[4]
    c1 = pad_ref.shape[2]
    rows1 = Hb + 2                     # h1 rows conv2 reads (band + 1-row halo)

    x = x_ref[0, 0]                    # (Hb+4, W+2, Cin) bf16

    # ---- conv1: in-kernel im2col (VMEM-only copies) + one fused K=9*Cin matmul
    # patch channel order = (dy*3 + dx)*Cin + ci, matching w1_ref rows.
    patches = jnp.concatenate(
        [x[dy:dy + rows1, dx:dx + W, :] for dy in range(3) for dx in range(3)],
        axis=-1)                                       # (rows1, W, 9*Cin) bf16
    h1 = jnp.dot(patches.reshape(rows1 * W, 9 * cin), w1_ref[...],
                 preferred_element_type=jnp.float32)
    h1 = jnp.maximum(h1 + b1_ref[...], 0.0)            # f32 bias + ReLU
    h1 = h1.astype(jnp.bfloat16).reshape(rows1, W, c1)

    # ---- conv2 input scratch: aligned interior write + minimal halo zeroing --
    pad_ref[:, pl.ds(LPAD, W), :] = h1                 # 16-aligned, unmasked
    zcol = jnp.zeros((rows1, 1, c1), jnp.bfloat16)
    pad_ref[:, pl.ds(LPAD - 1, 1), :] = zcol           # only columns conv2 reads
    pad_ref[:, pl.ds(LPAD + W, 1), :] = zcol
    # conv2's zero row-padding exists only at the image border: overwrite the
    # halo row with zeros only on the first / last band.
    band = pl.program_id(1)

    @pl.when(band == 0)
    def _():
        pad_ref[pl.ds(0, 1), pl.ds(LPAD, W), :] = jnp.zeros((1, W, c1), jnp.bfloat16)

    @pl.when(band == pl.num_programs(1) - 1)
    def _():
        pad_ref[pl.ds(Hb + 1, 1), pl.ds(LPAD, W), :] = jnp.zeros((1, W, c1), jnp.bfloat16)

    # ---- conv2 (3x3, pad 1): one column-shifted view per dx, reused by the
    # three dy taps (dy shifts are free leading-axis slices). bf16 MXU operands,
    # f32 accumulation.
    acc2 = jnp.zeros((Hb * W, c1), jnp.float32)
    for dx in range(3):
        cols = pad_ref[:, pl.ds(LPAD - 1 + dx, W), :]  # (Hb+2, W, C1) bf16
        for dy in range(3):
            patch = cols[dy:dy + Hb].reshape(Hb * W, c1)
            acc2 = acc2 + jnp.dot(patch, w2_ref[dy * 3 + dx],
                                  preferred_element_type=jnp.float32)
    h2 = jnp.maximum(acc2 + b2_ref[...], 0.0).astype(jnp.bfloat16)  # (Hb*W, C1)

    # ---- conv3 (1x1): contract C1; Hb*W stays on the lane axis ---------------
    logits = lax.dot_general(w3_ref[...], h2,
                             dimension_numbers=(((1,), (1,)), ((), ())),
                             preferred_element_type=jnp.float32)
    logits_ref[0, 0] = logits + b3_ref[...]            # (NC, Hb*W) f32


def dummy_model_forward(x_nchw, kernel_params, noise_nchw, *, row_band=8):
    """Runs the DummyModel forward (points=None). Returns (output, logits), NCHW."""
    w1k, b1k, w2k, b2k, w3k, b3k = kernel_params
    B, cin, H, W = x_nchw.shape
    c1 = w2k.shape[-1]
    nc = w3k.shape[0]
    Hb = min(row_band, H)
    assert H % Hb == 0, "demo wrapper assumes H is a multiple of the row band"
    assert W % 8 == 0, "demo wrapper assumes W is a multiple of 8"
    NB = H // Hb

    # Plain NHWC bf16 input with a 1-col / 2-row zero halo, then per-band
    # overlapping slices (pure layout plumbing done once by XLA; only Cin
    # channels travel to HBM -- no 9x im2col inflation).
    x_nhwc = jnp.transpose(x_nchw, (0, 2, 3, 1)).astype(jnp.bfloat16)
    x_pad = jnp.pad(x_nhwc, ((0, 0), (2, 2), (1, 1), (0, 0)))
    x_bands = jnp.stack(
        [x_pad[:, n * Hb: n * Hb + Hb + 4, :, :] for n in range(NB)], axis=1)
    # x_bands: (B, NB, Hb+4, W+2, Cin)

    logits_bands = pl.pallas_call(
        _dummy_model_kernel,
        out_shape=jax.ShapeDtypeStruct((B, NB, nc, Hb * W), jnp.float32),
        grid=(B, NB),
        in_specs=[
            pl.BlockSpec((1, 1, Hb + 4, W + 2, cin), lambda b, n: (b, n, 0, 0, 0)),
            pl.BlockSpec((9 * cin, c1), lambda b, n: (0, 0)),
            pl.BlockSpec((1, c1), lambda b, n: (0, 0)),
            pl.BlockSpec((9, c1, c1), lambda b, n: (0, 0, 0)),
            pl.BlockSpec((1, c1), lambda b, n: (0, 0)),
            pl.BlockSpec((nc, c1), lambda b, n: (0, 0)),
            pl.BlockSpec((nc, 1), lambda b, n: (0, 0)),
        ],
        out_specs=pl.BlockSpec((1, 1, nc, Hb * W), lambda b, n: (b, n, 0, 0)),
        scratch_shapes=[pltpu.VMEM((Hb + 2, W + 2 * LPAD, c1), jnp.bfloat16)],
        compiler_params=pltpu.CompilerParams(
            dimension_semantics=("parallel", "parallel"),
            vmem_limit_bytes=32 * 1024 * 1024),
    )(x_bands, w1k, b1k, w2k, b2k, w3k, b3k)

    logits_nchw = jnp.transpose(
        logits_bands.reshape(B, NB, nc, Hb, W), (0, 2, 1, 3, 4)).reshape(B, nc, H, W)
    # points=None branch: sigmoid of gaussian noise, computed outside the
    # kernel (depends only on the noise input; plain XLA elementwise).
    out_nchw = jax.nn.sigmoid(noise_nchw.astype(jnp.float32))
    return out_nchw, logits_nchw


def init_params(key, cin=3, c1=64, nc=1):
    """Deterministic synthetic parameters in PyTorch OIHW layout."""
    k1, k2, k3, k4, k5, k6 = jax.random.split(key, 6)
    w1 = jax.random.normal(k1, (c1, cin, 3, 3), jnp.float32) / jnp.sqrt(cin * 9.0)
    b1 = jax.random.normal(k2, (c1,), jnp.float32) * 0.05
    w2 = jax.random.normal(k3, (c1, c1, 3, 3), jnp.float32) / jnp.sqrt(c1 * 9.0)
    b2 = jax.random.normal(k4, (c1,), jnp.float32) * 0.05
    w3 = jax.random.normal(k5, (nc, c1, 1, 1), jnp.float32) / jnp.sqrt(float(c1))
    b3 = jax.random.normal(k6, (nc,), jnp.float32) * 0.05
    return (w1, b1, w2, b2, w3, b3)


def to_kernel_params(torch_params):
    """OIHW torch layout -> kernel layout (bf16 MXU operands, f32 biases)."""
    w1, b1, w2, b2, w3, b3 = torch_params
    c1, cin = w1.shape[0], w1.shape[1]
    nc = w3.shape[0]
    # conv1 fused: row index = (ky*3+kx)*Cin + ci  -> (9*Cin, C1)
    w1k = jnp.transpose(w1, (2, 3, 1, 0)).reshape(9 * cin, c1).astype(jnp.bfloat16)
    # conv2 taps: (9, C1_in, C1_out)
    w2k = jnp.transpose(w2, (2, 3, 1, 0)).reshape(9, c1, c1).astype(jnp.bfloat16)
    # conv3: (NC, C1) so the kernel keeps H*W on the lane axis
    w3k = w3[:, :, 0, 0].astype(jnp.bfloat16)
    return (w1k, b1.reshape(1, c1).astype(jnp.float32),
            w2k, b2.reshape(1, c1).astype(jnp.float32),
            w3k, b3.reshape(nc, 1).astype(jnp.float32))


def ref_logits(x_nchw, torch_params):
    """Pure-JAX f32 reference for the conv stack (NCHW, matches PyTorch)."""
    w1, b1, w2, b2, w3, b3 = torch_params
    dn = ('NCHW', 'OIHW', 'NCHW')
    y = lax.conv_general_dilated(x_nchw, w1, (1, 1), 'SAME', dimension_numbers=dn)
    y = jnp.maximum(y + b1[None, :, None, None], 0.0)
    y = lax.conv_general_dilated(y, w2, (1, 1), 'SAME', dimension_numbers=dn)
    y = jnp.maximum(y + b2[None, :, None, None], 0.0)
    y = lax.conv_general_dilated(y, w3, (1, 1), 'SAME', dimension_numbers=dn)
    return y + b3[None, :, None, None]


if __name__ == "__main__":
    B, CIN, H, W, NC = 2, 3, 16, 16, 1
    key = jax.random.PRNGKey(0)
    kx, kn, kp = jax.random.split(key, 3)

    x = jax.random.normal(kx, (B, CIN, H, W), jnp.float32)
    # stands in for torch.randn_like(conv3_output) in the points=None branch
    noise = jax.random.normal(kn, (B, NC, H, W), jnp.float32)

    torch_params = init_params(kp, CIN, 64, NC)
    kparams = to_kernel_params(torch_params)

    out, logits = dummy_model_forward(x, kparams, noise, row_band=8)
    out = jax.block_until_ready(out)
    logits = jax.block_until_ready(logits)

    ref = ref_logits(x, torch_params)
    assert out.shape == (B, NC, H, W)
    # bf16 MXU operands with f32 accumulation -> loose-but-structural tolerance
    assert jnp.allclose(logits, ref, atol=5e-2, rtol=5e-2), "conv stack mismatch"
    assert jnp.allclose(out, jax.nn.sigmoid(noise), atol=1e-5), "output mismatch"
    print("KERNEL_OK")
</pallas_src>

<mosaic_0001>
module attributes {stable_mosaic.version = 11 : i64} {
  func.func @_dummy_model_kernel(%arg0: i32, %arg1: i32, %arg2: memref<1x1x12x18x3xbf16, #tpu.memory_space<vmem>>, %arg3: memref<27x64xbf16, #tpu.memory_space<vmem>>, %arg4: memref<1x64xf32, #tpu.memory_space<vmem>>, %arg5: memref<9x64x64xbf16, #tpu.memory_space<vmem>>, %arg6: memref<1x64xf32, #tpu.memory_space<vmem>>, %arg7: memref<1x64xbf16, #tpu.memory_space<vmem>>, %arg8: memref<1x1xf32, #tpu.memory_space<vmem>>, %arg9: memref<1x1x1x128xf32, #tpu.memory_space<vmem>>, %arg10: memref<10x48x64xbf16, #tpu.memory_space<vmem>>) attributes {dimension_semantics = [#tpu.dimension_semantics<parallel>, #tpu.dimension_semantics<parallel>], iteration_bounds = array<i64: 2, 2>, scalar_prefetch = 0 : i64, scratch_operands = 1 : i64, tpu.core_type = #tpu.core_type<tc>, window_params = [{transform_indices = @transform_0, window_bounds = array<i64: 1, 1, 12, 18, 3>}, {pipeline_mode = #tpu.pipeline_mode<synchronous>, transform_indices = @transform_1, window_bounds = array<i64: 27, 64>}, {pipeline_mode = #tpu.pipeline_mode<synchronous>, transform_indices = @transform_2, window_bounds = array<i64: 1, 64>}, {pipeline_mode = #tpu.pipeline_mode<synchronous>, transform_indices = @transform_3, window_bounds = array<i64: 9, 64, 64>}, {pipeline_mode = #tpu.pipeline_mode<synchronous>, transform_indices = @transform_4, window_bounds = array<i64: 1, 64>}, {pipeline_mode = #tpu.pipeline_mode<synchronous>, transform_indices = @transform_5, window_bounds = array<i64: 1, 64>}, {pipeline_mode = #tpu.pipeline_mode<synchronous>, transform_indices = @transform_6, window_bounds = array<i64: 1, 1>}, {transform_indices = @transform_7, window_bounds = array<i64: 1, 1, 1, 128>}]} {
    %c0 = arith.constant 0 : index
    %c0_0 = arith.constant 0 : index
    %c0_1 = arith.constant 0 : index
    %c0_2 = arith.constant 0 : index
    %c0_3 = arith.constant 0 : index
    %0 = vector.load %arg2[%c0, %c0_0, %c0_1, %c0_2, %c0_3] : memref<1x1x12x18x3xbf16, #tpu.memory_space<vmem>>, vector<1x1x12x18x3xbf16>
    %1 = vector.shape_cast %0 : vector<1x1x12x18x3xbf16> to vector<12x18x3xbf16>
    %2 = vector.extract_strided_slice %1 {offsets = [0, 0, 0], sizes = [10, 16, 3], strides = [1, 1, 1]} : vector<12x18x3xbf16> to vector<10x16x3xbf16>
    %3 = vector.extract_strided_slice %1 {offsets = [0, 1, 0], sizes = [10, 16, 3], strides = [1, 1, 1]} : vector<12x18x3xbf16> to vector<10x16x3xbf16>
    %4 = vector.extract_strided_slice %1 {offsets = [0, 2, 0], sizes = [10, 16, 3], strides = [1, 1, 1]} : vector<12x18x3xbf16> to vector<10x16x3xbf16>
    %5 = vector.extract_strided_slice %1 {offsets = [1, 0, 0], sizes = [10, 16, 3], strides = [1, 1, 1]} : vector<12x18x3xbf16> to vector<10x16x3xbf16>
    %6 = vector.extract_strided_slice %1 {offsets = [1, 1, 0], sizes = [10, 16, 3], strides = [1, 1, 1]} : vector<12x18x3xbf16> to vector<10x16x3xbf16>
    %7 = vector.extract_strided_slice %1 {offsets = [1, 2, 0], sizes = [10, 16, 3], strides = [1, 1, 1]} : vector<12x18x3xbf16> to vector<10x16x3xbf16>
    %8 = vector.extract_strided_slice %1 {offsets = [2, 0, 0], sizes = [10, 16, 3], strides = [1, 1, 1]} : vector<12x18x3xbf16> to vector<10x16x3xbf16>
    %9 = vector.extract_strided_slice %1 {offsets = [2, 1, 0], sizes = [10, 16, 3], strides = [1, 1, 1]} : vector<12x18x3xbf16> to vector<10x16x3xbf16>
    %10 = vector.extract_strided_slice %1 {offsets = [2, 2, 0], sizes = [10, 16, 3], strides = [1, 1, 1]} : vector<12x18x3xbf16> to vector<10x16x3xbf16>
    %11 = tpu.concatenate %2, %3, %4, %5, %6, %7, %8, %9, %10 in 2 : vector<10x16x3xbf16>, vector<10x16x3xbf16>, vector<10x16x3xbf16>, vector<10x16x3xbf16>, vector<10x16x3xbf16>, vector<10x16x3xbf16>, vector<10x16x3xbf16>, vector<10x16x3xbf16>, vector<10x16x3xbf16> -> vector<10x16x27xbf16>
    %12 = vector.shape_cast %11 : vector<10x16x27xbf16> to vector<160x27xbf16>
    %c0_4 = arith.constant 0 : index
    %c0_5 = arith.constant 0 : index
    %13 = vector.load %arg3[%c0_4, %c0_5] : memref<27x64xbf16, #tpu.memory_space<vmem>>, vector<27x64xbf16>
    %cst = arith.constant dense<0.000000e+00> : vector<160x64xf32>
    %14 = tpu.matmul %12, %13, %cst {dimension_numbers = #tpu.dot_dimension_numbers<[1], [0], [0], [1], [0, 0, 1, 1], [], []>} : vector<160x27xbf16>, vector<27x64xbf16>, vector<160x64xf32> -> vector<160x64xf32>
    %c0_6 = arith.constant 0 : index
    %c0_7 = arith.constant 0 : index
    %15 = vector.load %arg4[%c0_6, %c0_7] : memref<1x64xf32, #tpu.memory_space<vmem>>, vector<1x64xf32>
    %16 = vector.broadcast %15 : vector<1x64xf32> to vector<160x64xf32>
    %17 = arith.addf %14, %16 : vector<160x64xf32>
    %cst_8 = arith.constant 0.000000e+00 : f32
    %18 = vector.broadcast %cst_8 : f32 to vector<160x64xf32>
    %19 = arith.maximumf %17, %18 : vector<160x64xf32>
    %20 = arith.truncf %19 : vector<160x64xf32> to vector<160x64xbf16>
    %21 = vector.shape_cast %20 : vector<160x64xbf16> to vector<10x16x64xbf16>
    %c0_9 = arith.constant 0 : index
    %c16 = arith.constant 16 : index
    %c0_10 = arith.constant 0 : index
    %22 = vector.load %arg10[%c0_9, %c16, %c0_10] : memref<10x48x64xbf16, #tpu.memory_space<vmem>>, vector<10x16x64xbf16>
    tpu.vector_store %arg10[%c0_9, %c16, %c0_10], %21 {strides = array<i32>} : memref<10x48x64xbf16, #tpu.memory_space<vmem>>, vector<10x16x64xbf16>,
    %cst_11 = arith.constant 0.000000e+00 : bf16
    %23 = vector.broadcast %cst_11 : bf16 to vector<10x1x64xbf16>
    %c0_12 = arith.constant 0 : index
    %c15 = arith.constant 15 : index
    %c0_13 = arith.constant 0 : index
    %24 = vector.load %arg10[%c0_12, %c15, %c0_13] : memref<10x48x64xbf16, #tpu.memory_space<vmem>>, vector<10x1x64xbf16>
    tpu.vector_store %arg10[%c0_12, %c15, %c0_13], %23 {strides = array<i32>} : memref<10x48x64xbf16, #tpu.memory_space<vmem>>, vector<10x1x64xbf16>,
    %c0_14 = arith.constant 0 : index
    %c32 = arith.constant 32 : index
    %c0_15 = arith.constant 0 : index
    %25 = vector.load %arg10[%c0_14, %c32, %c0_15] : memref<10x48x64xbf16, #tpu.memory_space<vmem>>, vector<10x1x64xbf16>
    tpu.vector_store %arg10[%c0_14, %c32, %c0_15], %23 {strides = array<i32>} : memref<10x48x64xbf16, #tpu.memory_space<vmem>>, vector<10x1x64xbf16>,
    %c0_i32 = arith.constant 0 : i32
    %26 = arith.cmpi eq, %arg1, %c0_i32 : i32
    %27 = arith.extui %26 : i1 to i32
    %c0_i32_16 = arith.constant 0 : i32
    %28 = arith.cmpi ne, %27, %c0_i32_16 : i32
    scf.if %28 {
      %cst_67 = arith.constant 0.000000e+00 : bf16
      %104 = vector.broadcast %cst_67 : bf16 to vector<1x16x64xbf16>
      %c0_68 = arith.constant 0 : index
      %c16_69 = arith.constant 16 : index
      %c0_70 = arith.constant 0 : index
      %105 = vector.load %arg10[%c0_68, %c16_69, %c0_70] : memref<10x48x64xbf16, #tpu.memory_space<vmem>>, vector<1x16x64xbf16>
      tpu.vector_store %arg10[%c0_68, %c16_69, %c0_70], %104 {strides = array<i32>} : memref<10x48x64xbf16, #tpu.memory_space<vmem>>, vector<1x16x64xbf16>,
    } else {
    }
    %c1_i32 = arith.constant 1 : i32
    %29 = arith.cmpi eq, %arg1, %c1_i32 : i32
    %30 = arith.extui %29 : i1 to i32
    %c0_i32_17 = arith.constant 0 : i32
    %31 = arith.cmpi ne, %30, %c0_i32_17 : i32
    scf.if %31 {
      %cst_67 = arith.constant 0.000000e+00 : bf16
      %104 = vector.broadcast %cst_67 : bf16 to vector<1x16x64xbf16>
      %c9 = arith.constant 9 : index
      %c16_68 = arith.constant 16 : index
      %c0_69 = arith.constant 0 : index
      %105 = vector.load %arg10[%c9, %c16_68, %c0_69] : memref<10x48x64xbf16, #tpu.memory_space<vmem>>, vector<1x16x64xbf16>
      tpu.vector_store %arg10[%c9, %c16_68, %c0_69], %104 {strides = array<i32>} : memref<10x48x64xbf16, #tpu.memory_space<vmem>>, vector<1x16x64xbf16>,
    } else {
    }
    %cst_18 = arith.constant 0.000000e+00 : f32
    %32 = vector.broadcast %cst_18 : f32 to vector<128x64xf32>
    %c0_19 = arith.constant 0 : index
    %c15_20 = arith.constant 15 : index
    %c0_21 = arith.constant 0 : index
    %33 = vector.load %arg10[%c0_19, %c15_20, %c0_21] : memref<10x48x64xbf16, #tpu.memory_space<vmem>>, vector<10x16x64xbf16>
    %34 = vector.extract_strided_slice %33 {offsets = [0, 0, 0], sizes = [8, 16, 64], strides = [1, 1, 1]} : vector<10x16x64xbf16> to vector<8x16x64xbf16>
    %35 = vector.shape_cast %34 : vector<8x16x64xbf16> to vector<128x64xbf16>
    %c0_22 = arith.constant 0 : index
    %c0_23 = arith.constant 0 : index
    %c0_24 = arith.constant 0 : index
    %36 = vector.load %arg5[%c0_22, %c0_23, %c0_24] : memref<9x64x64xbf16, #tpu.memory_space<vmem>>, vector<1x64x64xbf16>
    %37 = vector.shape_cast %36 : vector<1x64x64xbf16> to vector<64x64xbf16>
    %cst_25 = arith.constant dense<0.000000e+00> : vector<128x64xf32>
    %38 = tpu.matmul %35, %37, %cst_25 {dimension_numbers = #tpu.dot_dimension_numbers<[1], [0], [0], [1], [0, 0, 1, 1], [], []>} : vector<128x64xbf16>, vector<64x64xbf16>, vector<128x64xf32> -> vector<128x64xf32>
    %39 = arith.addf %32, %38 : vector<128x64xf32>
    %40 = vector.extract_strided_slice %33 {offsets = [1, 0, 0], sizes = [8, 16, 64], strides = [1, 1, 1]} : vector<10x16x64xbf16> to vector<8x16x64xbf16>
    %41 = vector.shape_cast %40 : vector<8x16x64xbf16> to vector<128x64xbf16>
    %c3 = arith.constant 3 : index
    %c0_26 = arith.constant 0 : index
    %c0_27 = arith.constant 0 : index
    %42 = vector.load %arg5[%c3, %c0_26, %c0_27] : memref<9x64x64xbf16, #tpu.memory_space<vmem>>, vector<1x64x64xbf16>
    %43 = vector.shape_cast %42 : vector<1x64x64xbf16> to vector<64x64xbf16>
    %cst_28 = arith.constant dense<0.000000e+00> : vector<128x64xf32>
    %44 = tpu.matmul %41, %43, %cst_28 {dimension_numbers = #tpu.dot_dimension_numbers<[1], [0], [0], [1], [0, 0, 1, 1], [], []>} : vector<128x64xbf16>, vector<64x64xbf16>, vector<128x64xf32> -> vector<128x64xf32>
    %45 = arith.addf %39, %44 : vector<128x64xf32>
    %46 = vector.extract_strided_slice %33 {offsets = [2, 0, 0], sizes = [8, 16, 64], strides = [1, 1, 1]} : vector<10x16x64xbf16> to vector<8x16x64xbf16>
    %47 = vector.shape_cast %46 : vector<8x16x64xbf16> to vector<128x64xbf16>
    %c6 = arith.constant 6 : index
    %c0_29 = arith.constant 0 : index
    %c0_30 = arith.constant 0 : index
    %48 = vector.load %arg5[%c6, %c0_29, %c0_30] : memref<9x64x64xbf16, #tpu.memory_space<vmem>>, vector<1x64x64xbf16>
    %49 = vector.shape_cast %48 : vector<1x64x64xbf16> to vector<64x64xbf16>
    %cst_31 = arith.constant dense<0.000000e+00> : vector<128x64xf32>
    %50 = tpu.matmul %47, %49, %cst_31 {dimension_numbers = #tpu.dot_dimension_numbers<[1], [0], [0], [1], [0, 0, 1, 1], [], []>} : vector<128x64xbf16>, vector<64x64xbf16>, vector<128x64xf32> -> vector<128x64xf32>
    %51 = arith.addf %45, %50 : vector<128x64xf32>
    %c0_32 = arith.constant 0 : index
    %c16_33 = arith.constant 16 : index
    %c0_34 = arith.constant 0 : index
    %52 = vector.load %arg10[%c0_32, %c16_33, %c0_34] : memref<10x48x64xbf16, #tpu.memory_space<vmem>>, vector<10x16x64xbf16>
    %53 = vector.extract_strided_slice %52 {offsets = [0, 0, 0], sizes = [8, 16, 64], strides = [1, 1, 1]} : vector<10x16x64xbf16> to vector<8x16x64xbf16>
    %54 = vector.shape_cast %53 : vector<8x16x64xbf16> to vector<128x64xbf16>
    %c1 = arith.constant 1 : index
    %c0_35 = arith.constant 0 : index
    %c0_36 = arith.constant 0 : index
    %55 = vector.load %arg5[%c1, %c0_35, %c0_36] : memref<9x64x64xbf16, #tpu.memory_space<vmem>>, vector<1x64x64xbf16>
    %56 = vector.shape_cast %55 : vector<1x64x64xbf16> to vector<64x64xbf16>
    %cst_37 = arith.constant dense<0.000000e+00> : vector<128x64xf32>
    %57 = tpu.matmul %54, %56, %cst_37 {dimension_numbers = #tpu.dot_dimension_numbers<[1], [0], [0], [1], [0, 0, 1, 1], [], []>} : vector<128x64xbf16>, vector<64x64xbf16>, vector<128x64xf32> -> vector<128x64xf32>
    %58 = arith.addf %51, %57 : vector<128x64xf32>
    %59 = vector.extract_strided_slice %52 {offsets = [1, 0, 0], sizes = [8, 16, 64], strides = [1, 1, 1]} : vector<10x16x64xbf16> to vector<8x16x64xbf16>
    %60 = vector.shape_cast %59 : vector<8x16x64xbf16> to vector<128x64xbf16>
    %c4 = arith.constant 4 : index
    %c0_38 = arith.constant 0 : index
    %c0_39 = arith.constant 0 : index
    %61 = vector.load %arg5[%c4, %c0_38, %c0_39] : memref<9x64x64xbf16, #tpu.memory_space<vmem>>, vector<1x64x64xbf16>
    %62 = vector.shape_cast %61 : vector<1x64x64xbf16> to vector<64x64xbf16>
    %cst_40 = arith.constant dense<0.000000e+00> : vector<128x64xf32>
    %63 = tpu.matmul %60, %62, %cst_40 {dimension_numbers = #tpu.dot_dimension_numbers<[1], [0], [0], [1], [0, 0, 1, 1], [], []>} : vector<128x64xbf16>, vector<64x64xbf16>, vector<128x64xf32> -> vector<128x64xf32>
    %64 = arith.addf %58, %63 : vector<128x64xf32>
    %65 = vector.extract_strided_slice %52 {offsets = [2, 0, 0], sizes = [8, 16, 64], strides = [1, 1, 1]} : vector<10x16x64xbf16> to vector<8x16x64xbf16>
    %66 = vector.shape_cast %65 : vector<8x16x64xbf16> to vector<128x64xbf16>
    %c7 = arith.constant 7 : index
    %c0_41 = arith.constant 0 : index
    %c0_42 = arith.constant 0 : index
    %67 = vector.load %arg5[%c7, %c0_41, %c0_42] : memref<9x64x64xbf16, #tpu.memory_space<vmem>>, vector<1x64x64xbf16>
    %68 = vector.shape_cast %67 : vector<1x64x64xbf16> to vector<64x64xbf16>
    %cst_43 = arith.constant dense<0.000000e+00> : vector<128x64xf32>
    %69 = tpu.matmul %66, %68, %cst_43 {dimension_numbers = #tpu.dot_dimension_numbers<[1], [0], [0], [1], [0, 0, 1, 1], [], []>} : vector<128x64xbf16>, vector<64x64xbf16>, vector<128x64xf32> -> vector<128x64xf32>
    %70 = arith.addf %64, %69 : vector<128x64xf32>
    %c0_44 = arith.constant 0 : index
    %c17 = arith.constant 17 : index
    %c0_45 = arith.constant 0 : index
    %71 = vector.load %arg10[%c0_44, %c17, %c0_45] : memref<10x48x64xbf16, #tpu.memory_space<vmem>>, vector<10x16x64xbf16>
    %72 = vector.extract_strided_slice %71 {offsets = [0, 0, 0], sizes = [8, 16, 64], strides = [1, 1, 1]} : vector<10x16x64xbf16> to vector<8x16x64xbf16>
    %73 = vector.shape_cast %72 : vector<8x16x64xbf16> to vector<128x64xbf16>
    %c2 = arith.constant 2 : index
    %c0_46 = arith.constant 0 : index
    %c0_47 = arith.constant 0 : index
    %74 = vector.load %arg5[%c2, %c0_46, %c0_47] : memref<9x64x64xbf16, #tpu.memory_space<vmem>>, vector<1x64x64xbf16>
    %75 = vector.shape_cast %74 : vector<1x64x64xbf16> to vector<64x64xbf16>
    %cst_48 = arith.constant dense<0.000000e+00> : vector<128x64xf32>
    %76 = tpu.matmul %73, %75, %cst_48 {dimension_numbers = #tpu.dot_dimension_numbers<[1], [0], [0], [1], [0, 0, 1, 1], [], []>} : vector<128x64xbf16>, vector<64x64xbf16>, vector<128x64xf32> -> vector<128x64xf32>
    %77 = arith.addf %70, %76 : vector<128x64xf32>
    %78 = vector.extract_strided_slice %71 {offsets = [1, 0, 0], sizes = [8, 16, 64], strides = [1, 1, 1]} : vector<10x16x64xbf16> to vector<8x16x64xbf16>
    %79 = vector.shape_cast %78 : vector<8x16x64xbf16> to vector<128x64xbf16>
    %c5 = arith.constant 5 : index
    %c0_49 = arith.constant 0 : index
    %c0_50 = arith.constant 0 : index
    %80 = vector.load %arg5[%c5, %c0_49, %c0_50] : memref<9x64x64xbf16, #tpu.memory_space<vmem>>, vector<1x64x64xbf16>
    %81 = vector.shape_cast %80 : vector<1x64x64xbf16> to vector<64x64xbf16>
    %cst_51 = arith.constant dense<0.000000e+00> : vector<128x64xf32>
    %82 = tpu.matmul %79, %81, %cst_51 {dimension_numbers = #tpu.dot_dimension_numbers<[1], [0], [0], [1], [0, 0, 1, 1], [], []>} : vector<128x64xbf16>, vector<64x64xbf16>, vector<128x64xf32> -> vector<128x64xf32>
    %83 = arith.addf %77, %82 : vector<128x64xf32>
    %84 = vector.extract_strided_slice %71 {offsets = [2, 0, 0], sizes = [8, 16, 64], strides = [1, 1, 1]} : vector<10x16x64xbf16> to vector<8x16x64xbf16>
    %85 = vector.shape_cast %84 : vector<8x16x64xbf16> to vector<128x64xbf16>
    %c8 = arith.constant 8 : index
    %c0_52 = arith.constant 0 : index
    %c0_53 = arith.constant 0 : index
    %86 = vector.load %arg5[%c8, %c0_52, %c0_53] : memref<9x64x64xbf16, #tpu.memory_space<vmem>>, vector<1x64x64xbf16>
    %87 = vector.shape_cast %86 : vector<1x64x64xbf16> to vector<64x64xbf16>
    %cst_54 = arith.constant dense<0.000000e+00> : vector<128x64xf32>
    %88 = tpu.matmul %85, %87, %cst_54 {dimension_numbers = #tpu.dot_dimension_numbers<[1], [0], [0], [1], [0, 0, 1, 1], [], []>} : vector<128x64xbf16>, vector<64x64xbf16>, vector<128x64xf32> -> vector<128x64xf32>
    %89 = arith.addf %83, %88 : vector<128x64xf32>
    %c0_55 = arith.constant 0 : index
    %c0_56 = arith.constant 0 : index
    %90 = vector.load %arg6[%c0_55, %c0_56] : memref<1x64xf32, #tpu.memory_space<vmem>>, vector<1x64xf32>
    %91 = vector.broadcast %90 : vector<1x64xf32> to vector<128x64xf32>
    %92 = arith.addf %89, %91 : vector<128x64xf32>
    %cst_57 = arith.constant 0.000000e+00 : f32
    %93 = vector.broadcast %cst_57 : f32 to vector<128x64xf32>
    %94 = arith.maximumf %92, %93 : vector<128x64xf32>
    %95 = arith.truncf %94 : vector<128x64xf32> to vector<128x64xbf16>
    %c0_58 = arith.constant 0 : index
    %c0_59 = arith.constant 0 : index
    %96 = vector.load %arg7[%c0_58, %c0_59] : memref<1x64xbf16, #tpu.memory_space<vmem>>, vector<1x64xbf16>
    %cst_60 = arith.constant dense<0.000000e+00> : vector<1x128xf32>
    %97 = tpu.matmul %96, %95, %cst_60 {dimension_numbers = #tpu.dot_dimension_numbers<[1], [1], [0], [0], [0, 0, 1, 0], [], []>} : vector<1x64xbf16>, vector<128x64xbf16>, vector<1x128xf32> -> vector<1x128xf32>
    %c0_61 = arith.constant 0 : index
    %c0_62 = arith.constant 0 : index
    %98 = vector.load %arg8[%c0_61, %c0_62] : memref<1x1xf32, #tpu.memory_space<vmem>>, vector<1x1xf32>
    %99 = vector.broadcast %98 : vector<1x1xf32> to vector<1x128xf32>
    %100 = arith.addf %97, %99 : vector<1x128xf32>
    %c0_63 = arith.constant 0 : index
    %c0_64 = arith.constant 0 : index
    %c0_65 = arith.constant 0 : index
    %c0_66 = arith.constant 0 : index
    %101 = vector.load %arg9[%c0_63, %c0_64, %c0_65, %c0_66] : memref<1x1x1x128xf32, #tpu.memory_space<vmem>>, vector<1x1x1x128xf32>
    %102 = vector.shape_cast %101 : vector<1x1x1x128xf32> to vector<1x128xf32>
    %103 = vector.shape_cast %100 : vector<1x128xf32> to vector<1x1x1x128xf32>
    tpu.vector_store %arg9[%c0_63, %c0_64, %c0_65, %c0_66], %103 {strides = array<i32>} : memref<1x1x1x128xf32, #tpu.memory_space<vmem>>, vector<1x1x1x128xf32>,
    return
  }
  func.func @transform_0(%arg0: i32, %arg1: i32) -> (i32, i32, i32, i32, i32) {
    %c0_i32 = arith.constant 0 : i32
    %c0_i32_0 = arith.constant 0 : i32
    %c0_i32_1 = arith.constant 0 : i32
    %c0_i32_2 = arith.constant 0 : i32
    return %arg0, %arg1, %c0_i32, %c0_i32_0, %c0_i32_1 : i32, i32, i32, i32, i32
  }
  func.func @transform_1(%arg0: i32, %arg1: i32) -> (i32, i32) {
    %c0_i32 = arith.constant 0 : i32
    %c0_i32_0 = arith.constant 0 : i32
    %c0_i32_1 = arith.constant 0 : i32
    return %c0_i32, %c0_i32_0 : i32, i32
  }
  func.func @transform_2(%arg0: i32, %arg1: i32) -> (i32, i32) {
    %c0_i32 = arith.constant 0 : i32
    %c0_i32_0 = arith.constant 0 : i32
    %c0_i32_1 = arith.constant 0 : i32
    return %c0_i32, %c0_i32_0 : i32, i32
  }
  func.func @transform_3(%arg0: i32, %arg1: i32) -> (i32, i32, i32) {
    %c0_i32 = arith.constant 0 : i32
    %c0_i32_0 = arith.constant 0 : i32
    %c0_i32_1 = arith.constant 0 : i32
    %c0_i32_2 = arith.constant 0 : i32
    return %c0_i32, %c0_i32_0, %c0_i32_1 : i32, i32, i32
  }
  func.func @transform_4(%arg0: i32, %arg1: i32) -> (i32, i32) {
    %c0_i32 = arith.constant 0 : i32
    %c0_i32_0 = arith.constant 0 : i32
    %c0_i32_1 = arith.constant 0 : i32
    return %c0_i32, %c0_i32_0 : i32, i32
  }
  func.func @transform_5(%arg0: i32, %arg1: i32) -> (i32, i32) {
    %c0_i32 = arith.constant 0 : i32
    %c0_i32_0 = arith.constant 0 : i32
    %c0_i32_1 = arith.constant 0 : i32
    return %c0_i32, %c0_i32_0 : i32, i32
  }
  func.func @transform_6(%arg0: i32, %arg1: i32) -> (i32, i32) {
    %c0_i32 = arith.constant 0 : i32
    %c0_i32_0 = arith.constant 0 : i32
    %c0_i32_1 = arith.constant 0 : i32
    return %c0_i32, %c0_i32_0 : i32, i32
  }
  func.func @transform_7(%arg0: i32, %arg1: i32) -> (i32, i32, i32, i32) {
    %c0_i32 = arith.constant 0 : i32
    %c0_i32_0 = arith.constant 0 : i32
    %c0_i32_1 = arith.constant 0 : i32
    return %arg0, %arg1, %c0_i32, %c0_i32_0 : i32, i32, i32, i32
  }
}

</mosaic_0001>

<llo_original>
// kernel: tpu_custom_call.1
$region0: #{tpu_custom_call.1}
  #allocation0 [shape = 'u32[]', space=smem, size = 0x4, offset = 0x4, fixed_abs, tag = 'smem constant byte address 0x4 - core index']
  #allocation1 [shape = 'u32[72,128]{1,0:T(1,128)}', space=vmem, size = 0x9000, scoped, tag = 'internal scratch']
  #allocation2 [shape = 'bf16[10,48,64]{2,1,0:T(8,128)(2,1)}', space=vmem, size = 0x1e000, scoped, tag = 'scratch operand']
  #allocation3 [shape = 'f32[1,1]{1,0:T(1,128)S(1)}', space=vmem, size = 0x200, scoped, tag = 'scoped memory for tpu_custom_call.1']
  %s0 = inlined_call_operand.vmem [shape: bf16[2,2,12,18,3], index: 0, kind: input, shape index: {}]
  %s1 = inlined_call_operand.vmem [shape: bf16[27,64], index: 1, kind: input, shape index: {}]
  %s2 = inlined_call_operand.vmem [shape: f32[1,64], index: 2, kind: input, shape index: {}]
  %s3 = inlined_call_operand.vmem [shape: bf16[9,64,64], index: 3, kind: input, shape index: {}]
  %s4 = inlined_call_operand.vmem [shape: f32[1,64], index: 4, kind: input, shape index: {}]
  %s5 = inlined_call_operand.vmem [shape: bf16[1,64], index: 5, kind: input, shape index: {}]
  %s6 = inlined_call_operand.<no memory space> [shape: f32[1,1], index: 6, kind: input, shape index: {}]
  %s7 = inlined_call_operand.hbm [shape: f32[2,2,1,128], index: 7, kind: output, shape index: {}]
  %s8 = sld [smem:[#allocation0]]
  $region69: #{tpu_custom_call.1} parent=0
    _
  %s10 = ssub.s32 1, %s8
  %s11 = scalar_select 0, %s10, %s8
  %v12 = vstv %s6
  %13 = vst [vmem:[#allocation3] sm:$0x1] %v12
  $region1: #{tpu_custom_call.1} parent=0
    #allocation4 [shape = 'u8[1024]{0}', space=vmem, size = 0x400, scoped, tag = 'output window, operand 0']
    #allocation5 [shape = 's32[2]{0}', space=sflag, size = 0x8, scoped, tag = 'scoped memory for tpu_custom_call.1']
    %14 = vsyncpa [#allocation5], 0
    %s15 = scalar_lea.sflag [#allocation5], 1
    %16 = vsyncpa %s15, 0
    loop: start=0, step=1, limit=6
    $region2: #{tpu_custom_call.1} parent=1 // loop_pre_header
      _
    $region3: #{tpu_custom_call.1} parent=1 // loop_header
      %s18 = sphi 0, %s22
      %p19 = scmp.ge.s32.totalorder %s18, 6
      %s25 = sphi 0, %s37
      %s26 = sphi 0, %s33
      %s27 = sphi 0, %s25
      %s28 = sphi 0, %s26
      %s29 = sphi 0, %s27
      %s30 = sphi 0, %s28
      %s42 = sphi 0, %s44
      %s45 = sphi 0, %s42
      %s46 = sphi 0, %s45
      %s62 = sphi 0, %s46
      %s66 = sphi 0, %s66
      %s68 = sphi 0, %s66
      %s69 = sphi 0, %s68
      %s83 = sphi 0, %s69
      %s87 = sphi 0, %s87
      %s89 = sphi 0, %s87
      %s90 = sphi 0, %s89
      %s104 = sphi 0, %s90
      %s108 = sphi 0, %s108
      %s110 = sphi 0, %s108
      %s111 = sphi 0, %s110
      %s125 = sphi 0, %s111
      %s129 = sphi 0, %s129
      %s131 = sphi 0, %s129
      %s132 = sphi 0, %s131
      %s146 = sphi 0, %s132
      %s150 = sphi 0, %s150
      %s152 = sphi 0, %s150
      %s153 = sphi 0, %s152
      %s167 = sphi 0, %s153
      %s171 = sphi 0, %s171
      %s173 = sphi 0, %s171
      %s174 = sphi 0, %s173
      %s188 = sphi 0, %s174
      %s196 = sphi 0, %s198
      %s199 = sphi 0, %s196
      %s200 = sphi 0, %s199
      %s216 = sphi 0, %s200
    $region4: #{tpu_custom_call.1} parent=1 // loop_header_branch
      %21 = sbr.rel (%p19) target = $region8
    $region5: #{tpu_custom_call.1} parent=1 // loop_body
      %s23 = ssub.s32 %s18, 1
      %s24 = ssub.s32 %s18, 2
      %s31 = sadd.s32 1, %s26
      %p32 = scmp.ge.s32.totalorder %s31, 2
      %s33 = scalar_select %p32, 0, %s31
      %s34 = sadd.s32 1, %s25
      %s35 = scalar_select %p32, %s34, %s25
      %p36 = scmp.ge.s32.totalorder %s35, 2
      %s37 = scalar_select %p36, 0, %s35
      %s38 = ssub.s32 %s25, %s37
      %s39 = ssub.s32 %s26, %s33
      %s40 = sor.u32 %s38, %s39
      %p41 = scmp.eq.s32.totalorder %s40, 0
      %s43 = sadd.s32 %s42, 1
      %s44 = scalar_select %p41, %s42, %s43
      %p47 = pneg %p41
      %p48 = scmp.eq.s32.totalorder %s18, 3
      %p49 = por %p47, %p48
      %p50 = scmp.ne.s32.totalorder %s42, %s45
      %p51 = scmp.eq.s32.totalorder %s18, 0
      %p52 = por %p50, %p51
      %p53 = scmp.ne.s32.totalorder %s42, %s45
      %p54 = scmp.eq.s32.totalorder %s23, 3
      %p55 = por %p53, %p54
      %p56 = scmp.ne.s32.totalorder %s45, %s46
      %p57 = scmp.eq.s32.totalorder %s23, 0
      %p58 = por %p56, %p57
      %p59 = scmp.ne.s32.totalorder %s45, %s46
      %p60 = scmp.eq.s32.totalorder %s24, 3
      %p61 = por %p59, %p60
      %p63 = scmp.ne.s32.totalorder %s46, %s62
      %p64 = scmp.eq.s32.totalorder %s24, 0
      %p65 = por %p63, %p64
      %s67 = sadd.s32 %s66, 1
      %p70 = scmp.eq.s32.totalorder %s18, 3
      %p71 = scmp.ne.s32.totalorder %s66, %s68
      %p72 = scmp.eq.s32.totalorder %s18, 0
      %p73 = por %p71, %p72
      %p74 = scmp.ne.s32.totalorder %s66, %s68
      %p75 = scmp.eq.s32.totalorder %s23, 3
      %p76 = por %p74, %p75
      %p77 = scmp.ne.s32.totalorder %s68, %s69
      %p78 = scmp.eq.s32.totalorder %s23, 0
      %p79 = por %p77, %p78
      %p80 = scmp.ne.s32.totalorder %s68, %s69
      %p81 = scmp.eq.s32.totalorder %s24, 3
      %p82 = por %p80, %p81
      %p84 = scmp.ne.s32.totalorder %s69, %s83
      %p85 = scmp.eq.s32.totalorder %s24, 0
      %p86 = por %p84, %p85
      %s88 = sadd.s32 %s87, 1
      %p91 = scmp.eq.s32.totalorder %s18, 3
      %p92 = scmp.ne.s32.totalorder %s87, %s89
      %p93 = scmp.eq.s32.totalorder %s18, 0
      %p94 = por %p92, %p93
      %p95 = scmp.ne.s32.totalorder %s87, %s89
      %p96 = scmp.eq.s32.totalorder %s23, 3
      %p97 = por %p95, %p96
      %p98 = scmp.ne.s32.totalorder %s89, %s90
      %p99 = scmp.eq.s32.totalorder %s23, 0
      %p100 = por %p98, %p99
      %p101 = scmp.ne.s32.totalorder %s89, %s90
      %p102 = scmp.eq.s32.totalorder %s24, 3
      %p103 = por %p101, %p102
      %p105 = scmp.ne.s32.totalorder %s90, %s104
      %p106 = scmp.eq.s32.totalorder %s24, 0
      %p107 = por %p105, %p106
      %s109 = sadd.s32 %s108, 1
      %p112 = scmp.eq.s32.totalorder %s18, 3
      %p113 = scmp.ne.s32.totalorder %s108, %s110
      %p114 = scmp.eq.s32.totalorder %s18, 0
      %p115 = por %p113, %p114
      %p116 = scmp.ne.s32.totalorder %s108, %s110
      %p117 = scmp.eq.s32.totalorder %s23, 3
      %p118 = por %p116, %p117
      %p119 = scmp.ne.s32.totalorder %s110, %s111
      %p120 = scmp.eq.s32.totalorder %s23, 0
      %p121 = por %p119, %p120
      %p122 = scmp.ne.s32.totalorder %s110, %s111
      %p123 = scmp.eq.s32.totalorder %s24, 3
      %p124 = por %p122, %p123
      %p126 = scmp.ne.s32.totalorder %s111, %s125
      %p127 = scmp.eq.s32.totalorder %s24, 0
      %p128 = por %p126, %p127
      %s130 = sadd.s32 %s129, 1
      %p133 = scmp.eq.s32.totalorder %s18, 3
      %p134 = scmp.ne.s32.totalorder %s129, %s131
      %p135 = scmp.eq.s32.totalorder %s18, 0
      %p136 = por %p134, %p135
      %p137 = scmp.ne.s32.totalorder %s129, %s131
      %p138 = scmp.eq.s32.totalorder %s23, 3
      %p139 = por %p137, %p138
      %p140 = scmp.ne.s32.totalorder %s131, %s132
      %p141 = scmp.eq.s32.totalorder %s23, 0
      %p142 = por %p140, %p141
      %p143 = scmp.ne.s32.totalorder %s131, %s132
      %p144 = scmp.eq.s32.totalorder %s24, 3
      %p145 = por %p143, %p144
      %p147 = scmp.ne.s32.totalorder %s132, %s146
      %p148 = scmp.eq.s32.totalorder %s24, 0
      %p149 = por %p147, %p148
      %s151 = sadd.s32 %s150, 1
      %p154 = scmp.eq.s32.totalorder %s18, 3
      %p155 = scmp.ne.s32.totalorder %s150, %s152
      %p156 = scmp.eq.s32.totalorder %s18, 0
      %p157 = por %p155, %p156
      %p158 = scmp.ne.s32.totalorder %s150, %s152
      %p159 = scmp.eq.s32.totalorder %s23, 3
      %p160 = por %p158, %p159
      %p161 = scmp.ne.s32.totalorder %s152, %s153
      %p162 = scmp.eq.s32.totalorder %s23, 0
      %p163 = por %p161, %p162
      %p164 = scmp.ne.s32.totalorder %s152, %s153
      %p165 = scmp.eq.s32.totalorder %s24, 3
      %p166 = por %p164, %p165
      %p168 = scmp.ne.s32.totalorder %s153, %s167
      %p169 = scmp.eq.s32.totalorder %s24, 0
      %p170 = por %p168, %p169
      %s172 = sadd.s32 %s171, 1
      %p175 = scmp.eq.s32.totalorder %s18, 3
      %p176 = scmp.ne.s32.totalorder %s171, %s173
      %p177 = scmp.eq.s32.totalorder %s18, 0
      %p178 = por %p176, %p177
      %p179 = scmp.ne.s32.totalorder %s171, %s173
      %p180 = scmp.eq.s32.totalorder %s23, 3
      %p181 = por %p179, %p180
      %p182 = scmp.ne.s32.totalorder %s173, %s174
      %p183 = scmp.eq.s32.totalorder %s23, 0
      %p184 = por %p182, %p183
      %p185 = scmp.ne.s32.totalorder %s173, %s174
      %p186 = scmp.eq.s32.totalorder %s24, 3
      %p187 = por %p185, %p186
      %p189 = scmp.ne.s32.totalorder %s174, %s188
      %p190 = scmp.eq.s32.totalorder %s24, 0
      %p191 = por %p189, %p190
      %s192 = ssub.s32 %s25, %s37
      %s193 = ssub.s32 %s26, %s33
      %s194 = sor.u32 %s192, %s193
      %p195 = scmp.eq.s32.totalorder %s194, 0
      %s197 = sadd.s32 %s196, 1
      %s198 = scalar_select %p195, %s196, %s197
      %p201 = pneg %p195
      %p202 = scmp.eq.s32.totalorder %s18, 3
      %p203 = por %p201, %p202
      %p204 = scmp.ne.s32.totalorder %s196, %s199
      %p205 = scmp.eq.s32.totalorder %s18, 0
      %p206 = por %p204, %p205
      %p207 = scmp.ne.s32.totalorder %s196, %s199
      %p208 = scmp.eq.s32.totalorder %s23, 3
      %p209 = por %p207, %p208
      %p210 = scmp.ne.s32.totalorder %s199, %s200
      %p211 = scmp.eq.s32.totalorder %s23, 0
      %p212 = por %p210, %p211
      %p213 = scmp.ne.s32.totalorder %s199, %s200
      %p214 = scmp.eq.s32.totalorder %s24, 3
      %p215 = por %p213, %p214
      %p217 = scmp.ne.s32.totalorder %s200, %s216
      %p218 = scmp.eq.s32.totalorder %s24, 0
      %p219 = por %p217, %p218
      %p220 = scmp.le.s32.totalorder 1, %s18
      %p221 = scmp.lt.s32.totalorder %s18, 5
      %p222 = pnand %p220, %p221
      %p223 = pneg %p222
      // Predicated region
      $region9: #{tpu_custom_call.1} parent=5 // pred_check
        _
      $region10: #{tpu_custom_call.1} parent=5 // pred_check_branch
        %225 = sbr.rel (%p222) target = $region12
      $region11: #{tpu_custom_call.1} parent=5 // pred_region
        %s226 = ssub.s32 %s18, 1
        // Predicated region
        $region13: #{tpu_custom_call.1} parent=11 // pred_check
          %p227 = pneg %p79
        $region14: #{tpu_custom_call.1} parent=11 // pred_check_branch
          %229 = sbr.rel (%p227) target = $region16
        $region15: #{tpu_custom_call.1} parent=11 // pred_region
          _
        $region16: #{tpu_custom_call.1} parent=11 // pred_fallthru
          _
        // Predicated region
        $region17: #{tpu_custom_call.1} parent=11 // pred_check
          %p230 = pneg %p100
        $region18: #{tpu_custom_call.1} parent=11 // pred_check_branch
          %232 = sbr.rel (%p230) target = $region20
        $region19: #{tpu_custom_call.1} parent=11 // pred_region
          _
        $region20: #{tpu_custom_call.1} parent=11 // pred_fallthru
          _
        // Predicated region
        $region21: #{tpu_custom_call.1} parent=11 // pred_check
          %p233 = pneg %p121
        $region22: #{tpu_custom_call.1} parent=11 // pred_check_branch
          %235 = sbr.rel (%p233) target = $region24
        $region23: #{tpu_custom_call.1} parent=11 // pred_region
          _
        $region24: #{tpu_custom_call.1} parent=11 // pred_fallthru
          _
        // Predicated region
        $region25: #{tpu_custom_call.1} parent=11 // pred_check
          %p236 = pneg %p142
        $region26: #{tpu_custom_call.1} parent=11 // pred_check_branch
          %238 = sbr.rel (%p236) target = $region28
        $region27: #{tpu_custom_call.1} parent=11 // pred_region
          _
        $region28: #{tpu_custom_call.1} parent=11 // pred_fallthru
          _
        // Predicated region
        $region29: #{tpu_custom_call.1} parent=11 // pred_check
          %p239 = pneg %p163
        $region30: #{tpu_custom_call.1} parent=11 // pred_check_branch
          %241 = sbr.rel (%p239) target = $region32
        $region31: #{tpu_custom_call.1} parent=11 // pred_region
          _
        $region32: #{tpu_custom_call.1} parent=11 // pred_fallthru
          _
        // Predicated region
        $region33: #{tpu_custom_call.1} parent=11 // pred_check
          %p242 = pneg %p184
        $region34: #{tpu_custom_call.1} parent=11 // pred_check_branch
          %244 = sbr.rel (%p242) target = $region36
        $region35: #{tpu_custom_call.1} parent=11 // pred_region
          _
        $region36: #{tpu_custom_call.1} parent=11 // pred_fallthru
          _
      $region12: #{tpu_custom_call.1} parent=5 // pred_fallthru
        _
      %p245 = scmp.lt.s32.totalorder %s18, 4
      // Predicated region
      $region37: #{tpu_custom_call.1} parent=5 // pred_check
        %p246 = pneg %p245
      $region38: #{tpu_custom_call.1} parent=5 // pred_check_branch
        %248 = sbr.rel (%p246) target = $region40
      $region39: #{tpu_custom_call.1} parent=5 // pred_region
        // Predicated region
        $region41: #{tpu_custom_call.1} parent=39 // pred_check
          %p249 = pneg %p52
        $region42: #{tpu_custom_call.1} parent=39 // pred_check_branch
          %251 = sbr.rel (%p249) target = $region44
        $region43: #{tpu_custom_call.1} parent=39 // pred_region
          %p252 = scmp.lt.s32.totalorder %s25, 1
          %s253 = scalar_select %p252, %s25, 1
          %p254 = scmp.lt.s32.totalorder %s26, 1
          %s255 = scalar_select %p254, %s26, 1
          %s256 = smul.addr %s255, 36
          %s257 = smul.addr %s253, 72
          %s258 = sadd.s32 %s256, %s257
          %s259 = smul.addr %s258, 4
          %s260 = scalar_lea.vmem %s0, %s259
        $region44: #{tpu_custom_call.1} parent=39 // pred_fallthru
          _
      $region40: #{tpu_custom_call.1} parent=5 // pred_fallthru
        _
      %p261 = scmp.le.s32.totalorder 1, %s18
      %p262 = scmp.lt.s32.totalorder %s18, 5
      %p263 = pnand %p261, %p262
      %p264 = pneg %p263
      // Predicated region
      $region45: #{tpu_custom_call.1} parent=5 // pred_check
        _
      $region46: #{tpu_custom_call.1} parent=5 // pred_check_branch
        %266 = sbr.rel (%p263) target = $region48
      $region47: #{tpu_custom_call.1} parent=5 // pred_region
        %s267 = ssub.s32 %s18, 1
        %p268 = scmp.lt.s32.totalorder %s27, 1
        %s269 = scalar_select %p268, %s27, 1
        %p270 = scmp.lt.s32.totalorder %s28, 1
        %s271 = scalar_select %p270, %s28, 1
        %s272 = smul.addr %s271, 36
        %s273 = smul.addr %s269, 72
        %s274 = sadd.s32 %s272, %s273
        %s275 = smul.addr %s274, 4
        %s276 = scalar_lea.vmem %s0, %s275
        %p277 = pneg %p58
        %p278 = pneg %p55
        %p279 = pneg %p79
        %p280 = pneg %p76
        %p281 = pneg %p100
        %p282 = pneg %p97
        %p283 = pneg %p121
        %p284 = pneg %p118
        %p285 = pneg %p142
        %p286 = pneg %p139
        %p287 = pneg %p163
        %p288 = pneg %p160
        %p289 = pneg %p184
        %p290 = pneg %p181
        %p291 = pneg %p212
        %p292 = pneg %p209
        %s293 = sand.u32 %s199, 1
        %s294 = scalar_lea.sflag [#allocation5], %s293
        %s295 = sand.u32 %s199, 1
        %s296 = scalar_lea.vmem [#allocation4], %s295
        %p297 = scmp.lt.s32.totalorder %s27, 1
        %s298 = scalar_select %p297, %s27, 1
        %p299 = scmp.lt.s32.totalorder %s28, 1
        %s300 = scalar_select %p299, %s28, 1
        %s301 = smul.addr %s300, 36
        %s302 = smul.addr %s298, 72
        %s303 = sadd.s32 %s301, %s302
        %s304 = smul.addr %s303, 4
        %s305 = scalar_lea.vmem %s0, %s304
        %v307 = vld [vmem:[%s305] sm:$0xf]
        %v308 = vld [vmem:[%s305 + $0x4] sm:$0xf]
        %v309 = vld [vmem:[%s305 + $0x8] sm:$0x1]
        %v310 = vld [vmem:[%s305 + $0xc] sm:$0xf]
        %v311 = vld [vmem:[%s305 + $0x10] sm:$0xf]
        %v312 = vld [vmem:[%s305 + $0x14] sm:$0x1]
        %v313 = vld [vmem:[%s305 + $0x18] sm:$0xf]
        %v314 = vld [vmem:[%s305 + $0x1c] sm:$0xf]
        %v315 = vld [vmem:[%s305 + $0x20] sm:$0x1]
        %v316 = vld [vmem:[%s305 + $0x24] sm:$0xf]
        %v317 = vld [vmem:[%s305 + $0x28] sm:$0xf]
        %v318 = vld [vmem:[%s305 + $0x2c] sm:$0x1]
        %v319 = vld [vmem:[%s305 + $0x30] sm:$0xf]
        %v320 = vld [vmem:[%s305 + $0x34] sm:$0xf]
        %v321 = vld [vmem:[%s305 + $0x38] sm:$0x1]
        %v322 = vld [vmem:[%s305 + $0x3c] sm:$0xf]
        %v323 = vld [vmem:[%s305 + $0x40] sm:$0xf]
        %v324 = vld [vmem:[%s305 + $0x44] sm:$0x1]
        %v325 = vld [vmem:[%s305 + $0x48] sm:$0xf]
        %v326 = vld [vmem:[%s305 + $0x4c] sm:$0xf]
        %v327 = vld [vmem:[%s305 + $0x50] sm:$0x1]
        %v328 = vld [vmem:[%s305 + $0x54] sm:$0xf]
        %v329 = vld [vmem:[%s305 + $0x58] sm:$0xf]
        %v330 = vld [vmem:[%s305 + $0x5c] sm:$0x1]
        %v331 = vld [vmem:[%s305 + $0x60] sm:$0xf]
        %v332 = vld [vmem:[%s305 + $0x64] sm:$0xf]
        %v333 = vld [vmem:[%s305 + $0x68] sm:$0x1]
        %v334 = vld [vmem:[%s305 + $0x6c] sm:$0xf]
        %v335 = vld [vmem:[%s305 + $0x70] sm:$0xf]
        %v336 = vld [vmem:[%s305 + $0x74] sm:$0x1]
        %v337 = vld [vmem:[%s305 + $0x78] sm:$0xf]
        %v338 = vld [vmem:[%s305 + $0x7c] sm:$0xf]
        %v339 = vld [vmem:[%s305 + $0x80] sm:$0x1]
        %v340 = vld [vmem:[%s305 + $0x84] sm:$0xf]
        %v341 = vld [vmem:[%s305 + $0x88] sm:$0xf]
        %v342 = vld [vmem:[%s305 + $0x8c] sm:$0x1]
        %v363 = vunpack.c.l.b16 %v307
        %v364 = vunpack.c.l.b16 %v308
        %v365 = vunpack.c.l.b16 %v310
        %v366 = vunpack.c.l.b16 %v311
        %v367 = vunpack.c.l.b16 %v313
        %v368 = vunpack.c.l.b16 %v314
        %v369 = vunpack.c.l.b16 %v316
        %v370 = vunpack.c.l.b16 %v317
        %v371 = vunpack.c.l.b16 %v319
        %v372 = vunpack.c.l.b16 %v320
        %v373 = vunpack.c.l.b16 %v322
        %v374 = vunpack.c.l.b16 %v323
        %v375 = vunpack.c.l.b16 %v325
        %v376 = vunpack.c.l.b16 %v326
        %v377 = vunpack.c.l.b16 %v328
        %v378 = vunpack.c.l.b16 %v329
        %v379 = vunpack.c.l.b16 %v331
        %v380 = vunpack.c.l.b16 %v332
        %v381 = vunpack.c.l.b16 %v334
        %v382 = vunpack.c.l.b16 %v335
        %v383 = vpack.c.b16 %v364, %v363
        %v384 = vpack.c.b16 %v366, %v365
        %v385 = vpack.c.b16 %v368, %v367
        %v386 = vpack.c.b16 %v370, %v369
        %v387 = vpack.c.b16 %v372, %v371
        %v388 = vpack.c.b16 %v374, %v373
        %v389 = vpack.c.b16 %v376, %v375
        %v390 = vpack.c.b16 %v378, %v377
        %v391 = vpack.c.b16 %v380, %v379
        %v392 = vpack.c.b16 %v382, %v381
        %v403 = vunpack.c.l.b16 %v309
        %v404 = vunpack.c.l.b16 %v312
        %v405 = vunpack.c.l.b16 %v315
        %v406 = vunpack.c.l.b16 %v318
        %v407 = vunpack.c.l.b16 %v321
        %v408 = vunpack.c.l.b16 %v324
        %v409 = vunpack.c.l.b16 %v327
        %v410 = vunpack.c.l.b16 %v330
        %v411 = vunpack.c.l.b16 %v333
        %v412 = vunpack.c.l.b16 %v336
        %v413 = vpack.c.b16 %v403, %v403
        %v414 = vpack.c.b16 %v404, %v404
        %v415 = vpack.c.b16 %v405, %v405
        %v416 = vpack.c.b16 %v406, %v406
        %v417 = vpack.c.b16 %v407, %v407
        %v418 = vpack.c.b16 %v408, %v408
        %v419 = vpack.c.b16 %v409, %v409
        %v420 = vpack.c.b16 %v410, %v410
        %v421 = vpack.c.b16 %v411, %v411
        %v422 = vpack.c.b16 %v412, %v412
        %vm423 = vsmask.f32 7424
        %v425 = vshrl.u32 %v383, 16
        %v427 = vshll.u32 %v383, 16
        %v429 = vrot.slane %v427, 1
        %v430 = vor.u32 %v425, %v429
        %v432 = vshll.u32 %v413, 16
        %v434 = vrot.slane %v432, 1
        %v435 = vsel %vm423, %v430, %v434
        %v437 = vshrl.u32 %v384, 16
        %v439 = vshll.u32 %v384, 16
        %v441 = vrot.slane %v439, 1
        %v442 = vor.u32 %v437, %v441
        %v444 = vshll.u32 %v414, 16
        %v446 = vrot.slane %v444, 1
        %v447 = vsel %vm423, %v442, %v446
        %v449 = vshrl.u32 %v385, 16
        %v451 = vshll.u32 %v385, 16
        %v453 = vrot.slane %v451, 1
        %v454 = vor.u32 %v449, %v453
        %v456 = vshll.u32 %v415, 16
        %v458 = vrot.slane %v456, 1
        %v459 = vsel %vm423, %v454, %v458
        %v461 = vshrl.u32 %v386, 16
        %v463 = vshll.u32 %v386, 16
        %v465 = vrot.slane %v463, 1
        %v466 = vor.u32 %v461, %v465
        %v468 = vshll.u32 %v416, 16
        %v470 = vrot.slane %v468, 1
        %v471 = vsel %vm423, %v466, %v470
        %v473 = vshrl.u32 %v387, 16
        %v475 = vshll.u32 %v387, 16
        %v477 = vrot.slane %v475, 1
        %v478 = vor.u32 %v473, %v477
        %v480 = vshll.u32 %v417, 16
        %v482 = vrot.slane %v480, 1
        %v483 = vsel %vm423, %v478, %v482
        %v485 = vshrl.u32 %v388, 16
        %v487 = vshll.u32 %v388, 16
        %v489 = vrot.slane %v487, 1
        %v490 = vor.u32 %v485, %v489
        %v492 = vshll.u32 %v418, 16
        %v494 = vrot.slane %v492, 1
        %v495 = vsel %vm423, %v490, %v494
        %v497 = vshrl.u32 %v389, 16
        %v499 = vshll.u32 %v389, 16
        %v501 = vrot.slane %v499, 1
        %v502 = vor.u32 %v497, %v501
        %v504 = vshll.u32 %v419, 16
        %v506 = vrot.slane %v504, 1
        %v507 = vsel %vm423, %v502, %v506
        %v509 = vshrl.u32 %v390, 16
        %v511 = vshll.u32 %v390, 16
        %v513 = vrot.slane %v511, 1
        %v514 = vor.u32 %v509, %v513
        %v516 = vshll.u32 %v420, 16
        %v518 = vrot.slane %v516, 1
        %v519 = vsel %vm423, %v514, %v518
        %v521 = vshrl.u32 %v391, 16
        %v523 = vshll.u32 %v391, 16
        %v525 = vrot.slane %v523, 1
        %v526 = vor.u32 %v521, %v525
        %v528 = vshll.u32 %v421, 16
        %v530 = vrot.slane %v528, 1
        %v531 = vsel %vm423, %v526, %v530
        %v533 = vshrl.u32 %v392, 16
        %v535 = vshll.u32 %v392, 16
        %v537 = vrot.slane %v535, 1
        %v538 = vor.u32 %v533, %v537
        %v540 = vshll.u32 %v422, 16
        %v542 = vrot.slane %v540, 1
        %v543 = vsel %vm423, %v538, %v542
        %544 = vrot.lane.b32.xlu0 %v435, 3
        %v545 = vpop.permute.xlu0 %544
        %546 = vrot.lane.b32.xlu0 %v447, 3
        %v547 = vpop.permute.xlu0 %546
        %548 = vrot.lane.b32.xlu0 %v459, 3
        %v549 = vpop.permute.xlu0 %548
        %550 = vrot.lane.b32.xlu0 %v471, 3
        %v551 = vpop.permute.xlu0 %550
        %552 = vrot.lane.b32.xlu0 %v483, 3
        %v553 = vpop.permute.xlu0 %552
        %554 = vrot.lane.b32.xlu0 %v495, 3
        %v555 = vpop.permute.xlu0 %554
        %556 = vrot.lane.b32.xlu0 %v507, 3
        %v557 = vpop.permute.xlu0 %556
        %558 = vrot.lane.b32.xlu0 %v519, 3
        %v559 = vpop.permute.xlu0 %558
        %560 = vrot.lane.b32.xlu0 %v531, 3
        %v561 = vpop.permute.xlu0 %560
        %562 = vrot.lane.b32.xlu0 %v543, 3
        %v563 = vpop.permute.xlu0 %562
        %vm564 = vcmask 1046528
        %v565 = vrot.slane %v383, 1
        %v566 = vrot.slane %v413, 1
        %v567 = vsel %vm564, %v565, %v566
        %v568 = vrot.slane %v384, 1
        %v569 = vrot.slane %v414, 1
        %v570 = vsel %vm564, %v568, %v569
        %v571 = vrot.slane %v385, 1
        %v572 = vrot.slane %v415, 1
        %v573 = vsel %vm564, %v571, %v572
        %v574 = vrot.slane %v386, 1
        %v575 = vrot.slane %v416, 1
        %v576 = vsel %vm564, %v574, %v575
        %v577 = vrot.slane %v387, 1
        %v578 = vrot.slane %v417, 1
        %v579 = vsel %vm564, %v577, %v578
        %v580 = vrot.slane %v388, 1
        %v581 = vrot.slane %v418, 1
        %v582 = vsel %vm564, %v580, %v581
        %v583 = vrot.slane %v389, 1
        %v584 = vrot.slane %v419, 1
        %v585 = vsel %vm564, %v583, %v584
        %v586 = vrot.slane %v390, 1
        %v587 = vrot.slane %v420, 1
        %v588 = vsel %vm564, %v586, %v587
        %v589 = vrot.slane %v391, 1
        %v590 = vrot.slane %v421, 1
        %v591 = vsel %vm564, %v589, %v590
        %v592 = vrot.slane %v392, 1
        %v593 = vrot.slane %v422, 1
        %v594 = vsel %vm564, %v592, %v593
        %595 = vrot.lane.b32.xlu0 %v567, 6
        %v596 = vpop.permute.xlu0 %595
        %597 = vrot.lane.b32.xlu0 %v570, 6
        %v598 = vpop.permute.xlu0 %597
        %599 = vrot.lane.b32.xlu0 %v573, 6
        %v600 = vpop.permute.xlu0 %599
        %601 = vrot.lane.b32.xlu0 %v576, 6
        %v602 = vpop.permute.xlu0 %601
        %603 = vrot.lane.b32.xlu0 %v579, 6
        %v604 = vpop.permute.xlu0 %603
        %605 = vrot.lane.b32.xlu0 %v582, 6
        %v606 = vpop.permute.xlu0 %605
        %607 = vrot.lane.b32.xlu0 %v585, 6
        %v608 = vpop.permute.xlu0 %607
        %609 = vrot.lane.b32.xlu0 %v588, 6
        %v610 = vpop.permute.xlu0 %609
        %611 = vrot.lane.b32.xlu0 %v591, 6
        %v612 = vpop.permute.xlu0 %611
        %613 = vrot.lane.b32.xlu0 %v594, 6
        %v614 = vpop.permute.xlu0 %613
        %v617 = vunpack.c.l.b16 %v337
        %v618 = vunpack.c.l.b16 %v338
        %v619 = vpack.c.b16 %v618, %v617
        %620 = vrot.lane.b32.xlu0 %v384, 9
        %v621 = vpop.permute.xlu0 %620
        %622 = vrot.lane.b32.xlu0 %v385, 9
        %v623 = vpop.permute.xlu0 %622
        %624 = vrot.lane.b32.xlu0 %v386, 9
        %v625 = vpop.permute.xlu0 %624
        %626 = vrot.lane.b32.xlu0 %v387, 9
        %v627 = vpop.permute.xlu0 %626
        %628 = vrot.lane.b32.xlu0 %v388, 9
        %v629 = vpop.permute.xlu0 %628
        %630 = vrot.lane.b32.xlu0 %v389, 9
        %v631 = vpop.permute.xlu0 %630
        %632 = vrot.lane.b32.xlu0 %v390, 9
        %v633 = vpop.permute.xlu0 %632
        %634 = vrot.lane.b32.xlu0 %v391, 9
        %v635 = vpop.permute.xlu0 %634
        %636 = vrot.lane.b32.xlu0 %v392, 9
        %v637 = vpop.permute.xlu0 %636
        %638 = vrot.lane.b32.xlu0 %v619, 9
        %v639 = vpop.permute.xlu0 %638
        %v641 = vunpack.c.l.b16 %v339
        %v642 = vpack.c.b16 %v641, %v641
        %v644 = vshrl.u32 %v619, 16
        %v646 = vshll.u32 %v619, 16
        %v648 = vrot.slane %v646, 1
        %v649 = vor.u32 %v644, %v648
        %v651 = vshll.u32 %v642, 16
        %v653 = vrot.slane %v651, 1
        %v654 = vsel %vm423, %v649, %v653
        %655 = vrot.lane.b32.xlu0 %v447, 12
        %v656 = vpop.permute.xlu0 %655
        %657 = vrot.lane.b32.xlu0 %v459, 12
        %v658 = vpop.permute.xlu0 %657
        %659 = vrot.lane.b32.xlu0 %v471, 12
        %v660 = vpop.permute.xlu0 %659
        %661 = vrot.lane.b32.xlu0 %v483, 12
        %v662 = vpop.permute.xlu0 %661
        %663 = vrot.lane.b32.xlu0 %v495, 12
        %v664 = vpop.permute.xlu0 %663
        %665 = vrot.lane.b32.xlu0 %v507, 12
        %v666 = vpop.permute.xlu0 %665
        %667 = vrot.lane.b32.xlu0 %v519, 12
        %v668 = vpop.permute.xlu0 %667
        %669 = vrot.lane.b32.xlu0 %v531, 12
        %v670 = vpop.permute.xlu0 %669
        %671 = vrot.lane.b32.xlu0 %v543, 12
        %v672 = vpop.permute.xlu0 %671
        %673 = vrot.lane.b32.xlu0 %v654, 12
        %v674 = vpop.permute.xlu0 %673
        %v675 = vrot.slane %v619, 1
        %v676 = vrot.slane %v642, 1
        %v677 = vsel %vm564, %v675, %v676
        %678 = vrot.lane.b32.xlu0 %v570, 15
        %v679 = vpop.permute.xlu0 %678
        %680 = vrot.lane.b32.xlu0 %v573, 15
        %v681 = vpop.permute.xlu0 %680
        %682 = vrot.lane.b32.xlu0 %v576, 15
        %v683 = vpop.permute.xlu0 %682
        %684 = vrot.lane.b32.xlu0 %v579, 15
        %v685 = vpop.permute.xlu0 %684
        %686 = vrot.lane.b32.xlu0 %v582, 15
        %v687 = vpop.permute.xlu0 %686
        %688 = vrot.lane.b32.xlu0 %v585, 15
        %v689 = vpop.permute.xlu0 %688
        %690 = vrot.lane.b32.xlu0 %v588, 15
        %v691 = vpop.permute.xlu0 %690
        %692 = vrot.lane.b32.xlu0 %v591, 15
        %v693 = vpop.permute.xlu0 %692
        %694 = vrot.lane.b32.xlu0 %v594, 15
        %v695 = vpop.permute.xlu0 %694
        %696 = vrot.lane.b32.xlu0 %v677, 15
        %v697 = vpop.permute.xlu0 %696
        %v700 = vunpack.c.l.b16 %v340
        %v701 = vunpack.c.l.b16 %v341
        %v702 = vpack.c.b16 %v701, %v700
        %703 = vrot.lane.b32.xlu0 %v385, 18
        %v704 = vpop.permute.xlu0 %703
        %705 = vrot.lane.b32.xlu0 %v386, 18
        %v706 = vpop.permute.xlu0 %705
        %707 = vrot.lane.b32.xlu0 %v387, 18
        %v708 = vpop.permute.xlu0 %707
        %709 = vrot.lane.b32.xlu0 %v388, 18
        %v710 = vpop.permute.xlu0 %709
        %711 = vrot.lane.b32.xlu0 %v389, 18
        %v712 = vpop.permute.xlu0 %711
        %713 = vrot.lane.b32.xlu0 %v390, 18
        %v714 = vpop.permute.xlu0 %713
        %715 = vrot.lane.b32.xlu0 %v391, 18
        %v716 = vpop.permute.xlu0 %715
        %717 = vrot.lane.b32.xlu0 %v392, 18
        %v718 = vpop.permute.xlu0 %717
        %719 = vrot.lane.b32.xlu0 %v619, 18
        %v720 = vpop.permute.xlu0 %719
        %721 = vrot.lane.b32.xlu0 %v702, 18
        %v722 = vpop.permute.xlu0 %721
        %v724 = vunpack.c.l.b16 %v342
        %v725 = vpack.c.b16 %v724, %v724
        %v727 = vshrl.u32 %v702, 16
        %v729 = vshll.u32 %v702, 16
        %v731 = vrot.slane %v729, 1
        %v732 = vor.u32 %v727, %v731
        %v734 = vshll.u32 %v725, 16
        %v736 = vrot.slane %v734, 1
        %v737 = vsel %vm423, %v732, %v736
        %738 = vrot.lane.b32.xlu0 %v459, 21
        %v739 = vpop.permute.xlu0 %738
        %740 = vrot.lane.b32.xlu0 %v471, 21
        %v741 = vpop.permute.xlu0 %740
        %742 = vrot.lane.b32.xlu0 %v483, 21
        %v743 = vpop.permute.xlu0 %742
        %744 = vrot.lane.b32.xlu0 %v495, 21
        %v745 = vpop.permute.xlu0 %744
        %746 = vrot.lane.b32.xlu0 %v507, 21
        %v747 = vpop.permute.xlu0 %746
        %748 = vrot.lane.b32.xlu0 %v519, 21
        %v749 = vpop.permute.xlu0 %748
        %750 = vrot.lane.b32.xlu0 %v531, 21
        %v751 = vpop.permute.xlu0 %750
        %752 = vrot.lane.b32.xlu0 %v543, 21
        %v753 = vpop.permute.xlu0 %752
        %754 = vrot.lane.b32.xlu0 %v654, 21
        %v755 = vpop.permute.xlu0 %754
        %756 = vrot.lane.b32.xlu0 %v737, 21
        %v757 = vpop.permute.xlu0 %756
        %v758 = vrot.slane %v702, 1
        %v759 = vrot.slane %v725, 1
        %v760 = vsel %vm564, %v758, %v759
        %761 = vrot.lane.b32.xlu0 %v573, 24
        %v762 = vpop.permute.xlu0 %761
        %763 = vrot.lane.b32.xlu0 %v576, 24
        %v764 = vpop.permute.xlu0 %763
        %765 = vrot.lane.b32.xlu0 %v579, 24
        %v766 = vpop.permute.xlu0 %765
        %767 = vrot.lane.b32.xlu0 %v582, 24
        %v768 = vpop.permute.xlu0 %767
        %769 = vrot.lane.b32.xlu0 %v585, 24
        %v770 = vpop.permute.xlu0 %769
        %771 = vrot.lane.b32.xlu0 %v588, 24
        %v772 = vpop.permute.xlu0 %771
        %773 = vrot.lane.b32.xlu0 %v591, 24
        %v774 = vpop.permute.xlu0 %773
        %775 = vrot.lane.b32.xlu0 %v594, 24
        %v776 = vpop.permute.xlu0 %775
        %777 = vrot.lane.b32.xlu0 %v677, 24
        %v778 = vpop.permute.xlu0 %777
        %779 = vrot.lane.b32.xlu0 %v760, 24
        %v780 = vpop.permute.xlu0 %779
        %vm781 = vcmask 23552
        %v783 = vsel %vm781, %v383, %v545
        %v785 = vsel %vm781, %v384, %v547
        %v787 = vsel %vm781, %v385, %v549
        %v789 = vsel %vm781, %v386, %v551
        %v791 = vsel %vm781, %v387, %v553
        %v793 = vsel %vm781, %v388, %v555
        %v795 = vsel %vm781, %v389, %v557
        %v797 = vsel %vm781, %v390, %v559
        %v799 = vsel %vm781, %v391, %v561
        %v801 = vsel %vm781, %v392, %v563
        %vm802 = vcmask 48128
        %v804 = vsel %vm802, %v783, %v596
        %v806 = vsel %vm802, %v785, %v598
        %v808 = vsel %vm802, %v787, %v600
        %v810 = vsel %vm802, %v789, %v602
        %v812 = vsel %vm802, %v791, %v604
        %v814 = vsel %vm802, %v793, %v606
        %v816 = vsel %vm802, %v795, %v608
        %v818 = vsel %vm802, %v797, %v610
        %v820 = vsel %vm802, %v799, %v612
        %v822 = vsel %vm802, %v801, %v614
        %vm823 = vcmask 72704
        %v825 = vsel %vm823, %v804, %v621
        %v827 = vsel %vm823, %v806, %v623
        %v829 = vsel %vm823, %v808, %v625
        %v831 = vsel %vm823, %v810, %v627
        %v833 = vsel %vm823, %v812, %v629
        %v835 = vsel %vm823, %v814, %v631
        %v837 = vsel %vm823, %v816, %v633
        %v839 = vsel %vm823, %v818, %v635
        %v841 = vsel %vm823, %v820, %v637
        %v843 = vsel %vm823, %v822, %v639
        %vm844 = vcmask 97280
        %v846 = vsel %vm844, %v825, %v656
        %v848 = vsel %vm844, %v827, %v658
        %v850 = vsel %vm844, %v829, %v660
        %v852 = vsel %vm844, %v831, %v662
        %v854 = vsel %vm844, %v833, %v664
        %v856 = vsel %vm844, %v835, %v666
        %v858 = vsel %vm844, %v837, %v668
        %v860 = vsel %vm844, %v839, %v670
        %v862 = vsel %vm844, %v841, %v672
        %v864 = vsel %vm844, %v843, %v674
        %vm865 = vcmask 121856
        %v867 = vsel %vm865, %v846, %v679
        %v869 = vsel %vm865, %v848, %v681
        %v871 = vsel %vm865, %v850, %v683
        %v873 = vsel %vm865, %v852, %v685
        %v875 = vsel %vm865, %v854, %v687
        %v877 = vsel %vm865, %v856, %v689
        %v879 = vsel %vm865, %v858, %v691
        %v881 = vsel %vm865, %v860, %v693
        %v883 = vsel %vm865, %v862, %v695
        %v885 = vsel %vm865, %v864, %v697
        %vm886 = vcmask 146432
        %v888 = vsel %vm886, %v867, %v704
        %v890 = vsel %vm886, %v869, %v706
        %v892 = vsel %vm886, %v871, %v708
        %v894 = vsel %vm886, %v873, %v710
        %v896 = vsel %vm886, %v875, %v712
        %v898 = vsel %vm886, %v877, %v714
        %v900 = vsel %vm886, %v879, %v716
        %v902 = vsel %vm886, %v881, %v718
        %v904 = vsel %vm886, %v883, %v720
        %v906 = vsel %vm886, %v885, %v722
        %vm907 = vcmask 171008
        %v909 = vsel %vm907, %v888, %v739
        %v911 = vsel %vm907, %v890, %v741
        %v913 = vsel %vm907, %v892, %v743
        %v915 = vsel %vm907, %v894, %v745
        %v917 = vsel %vm907, %v896, %v747
        %v919 = vsel %vm907, %v898, %v749
        %v921 = vsel %vm907, %v900, %v751
        %v923 = vsel %vm907, %v902, %v753
        %v925 = vsel %vm907, %v904, %v755
        %v927 = vsel %vm907, %v906, %v757
        %vm928 = vcmask 195584
        %v930 = vsel %vm928, %v909, %v762
        %v932 = vsel %vm928, %v911, %v764
        %v934 = vsel %vm928, %v913, %v766
        %v936 = vsel %vm928, %v915, %v768
        %v938 = vsel %vm928, %v917, %v770
        %v940 = vsel %vm928, %v919, %v772
        %v942 = vsel %vm928, %v921, %v774
        %v944 = vsel %vm928, %v923, %v776
        %v946 = vsel %vm928, %v925, %v778
        %v948 = vsel %vm928, %v927, %v780
        %v949 = vld [vmem:[%s1] sm:$0xf]
        %v950 = vld [vmem:[%s1 + $0x4] sm:$0xf]
        %v951 = vld [vmem:[%s1 + $0x8] sm:$0xf]
        %v952 = vld [vmem:[%s1 + $0xc] sm:$0x3]
        %v953 = vld [vmem:[%s2] sm:$0x1]
        %v955 = vperm.slane %v953, 0
        %v961 = vunpack.c.l.b16 %v949
        %v962 = vunpack.c.l.b16 %v950
        %v963 = vunpack.c.l.b16 %v951
        %v964 = vunpack.c.l.b16 %v952
        %v965 = vpack.c.b16 %v962, %v961
        %v966 = vpack.c.b16 %v964, %v963
        %vm968 = vcmask 220160
        %v969 = vsel %vm968, %v930, 0
        %v971 = vsel %vm968, %v932, 0
        %v973 = vsel %vm968, %v934, 0
        %v975 = vsel %vm968, %v936, 0
        %v977 = vsel %vm968, %v938, 0
        %v979 = vsel %vm968, %v940, 0
        %v981 = vsel %vm968, %v942, 0
        %v983 = vsel %vm968, %v944, 0
        %v985 = vsel %vm968, %v946, 0
        %v987 = vsel %vm968, %v948, 0
        %vm989 = vcmask 1044480
        %vm990 = vcmask 1045504
        %v991 = vsel %vm989, 4294967295, 65535
        %v992 = vsel %vm990, %v991, 0
        %v994 = vand.u32 %v966, %v992
        %996 = vmatpush.bf16.msra.mxu0 0
        %997 = vmatpush.bf16.msra.mxu0 0
        %998 = vmatpush.bf16.msra.mxu0 0
        %999 = vmatpush.bf16.msra.mxu0 0
        %1000 = vmatpush.bf16.msra.mxu0 0
        %1001 = vmatpush.bf16.msra.mxu0 0
        %1002 = vmatpush.bf16.msra.mxu0 %v994
        %1003 = vmatpush.bf16.msra.mxu0 %v965
        %1004 = vmatmul.bf16.gmra.mxu0 %v969
        %v1005 = vpop.f32.mrf.mxu0
        %v1006 = vadd.f32 %v955, %v1005
        %v1007 = vpop.f32.mrf.mxu0
        %v1008 = vadd.f32 %v955, %v1007
        %1009 = vmatmul.bf16.gmra.mxu0 %v971
        %v1010 = vpop.f32.mrf.mxu0
        %v1011 = vadd.f32 %v955, %v1010
        %v1012 = vpop.f32.mrf.mxu0
        %v1013 = vadd.f32 %v955, %v1012
        %1014 = vmatmul.bf16.gmra.mxu0 %v973
        %v1015 = vpop.f32.mrf.mxu0
        %v1016 = vadd.f32 %v955, %v1015
        %v1017 = vpop.f32.mrf.mxu0
        %v1018 = vadd.f32 %v955, %v1017
        %1019 = vmatmul.bf16.gmra.mxu0 %v975
        %v1020 = vpop.f32.mrf.mxu0
        %v1021 = vadd.f32 %v955, %v1020
        %v1022 = vpop.f32.mrf.mxu0
        %v1023 = vadd.f32 %v955, %v1022
        %1024 = vmatmul.bf16.gmra.mxu0 %v977
        %v1025 = vpop.f32.mrf.mxu0
        %v1026 = vadd.f32 %v955, %v1025
        %v1027 = vpop.f32.mrf.mxu0
        %v1028 = vadd.f32 %v955, %v1027
        %1029 = vmatmul.bf16.gmra.mxu0 %v979
        %v1030 = vpop.f32.mrf.mxu0
        %v1031 = vadd.f32 %v955, %v1030
        %v1032 = vpop.f32.mrf.mxu0
        %v1033 = vadd.f32 %v955, %v1032
        %1034 = vmatmul.bf16.gmra.mxu0 %v981
        %v1035 = vpop.f32.mrf.mxu0
        %v1036 = vadd.f32 %v955, %v1035
        %v1037 = vpop.f32.mrf.mxu0
        %v1038 = vadd.f32 %v955, %v1037
        %1039 = vmatmul.bf16.gmra.mxu0 %v983
        %v1040 = vpop.f32.mrf.mxu0
        %v1041 = vadd.f32 %v955, %v1040
        %v1042 = vpop.f32.mrf.mxu0
        %v1043 = vadd.f32 %v955, %v1042
        %1044 = vmatmul.bf16.gmra.mxu0 %v985
        %v1045 = vpop.f32.mrf.mxu0
        %v1046 = vadd.f32 %v955, %v1045
        %v1047 = vpop.f32.mrf.mxu0
        %v1048 = vadd.f32 %v955, %v1047
        %1049 = vmatmul.bf16.gmra.mxu0 %v987
        %v1050 = vpop.f32.mrf.mxu0
        %v1051 = vadd.f32 %v955, %v1050
        %v1052 = vpop.f32.mrf.mxu0
        %v1053 = vadd.f32 %v955, %v1052
        %1054 = vdwg.mxu0
        %v1055 = vmax.f32 %v1006, 0.0
        %v1056 = vmax.f32 %v1008, 0.0
        %v1057 = vmax.f32 %v1011, 0.0
        %v1058 = vmax.f32 %v1013, 0.0
        %v1059 = vmax.f32 %v1016, 0.0
        %v1060 = vmax.f32 %v1018, 0.0
        %v1061 = vmax.f32 %v1021, 0.0
        %v1062 = vmax.f32 %v1023, 0.0
        %v1063 = vmax.f32 %v1026, 0.0
        %v1064 = vmax.f32 %v1028, 0.0
        %v1065 = vmax.f32 %v1031, 0.0
        %v1066 = vmax.f32 %v1033, 0.0
        %v1067 = vmax.f32 %v1036, 0.0
        %v1068 = vmax.f32 %v1038, 0.0
        %v1069 = vmax.f32 %v1041, 0.0
        %v1070 = vmax.f32 %v1043, 0.0
        %v1071 = vmax.f32 %v1046, 0.0
        %v1072 = vmax.f32 %v1048, 0.0
        %v1073 = vmax.f32 %v1051, 0.0
        %v1074 = vmax.f32 %v1053, 0.0
        %v1075 = vpack.c.bf16 %v1055, %v1055
        %v1076 = vpack.c.bf16 %v1056, %v1056
        %v1077 = vpack.c.bf16 %v1057, %v1057
        %v1078 = vpack.c.bf16 %v1058, %v1058
        %v1079 = vpack.c.bf16 %v1059, %v1059
        %v1080 = vpack.c.bf16 %v1060, %v1060
        %v1081 = vpack.c.bf16 %v1061, %v1061
        %v1082 = vpack.c.bf16 %v1062, %v1062
        %v1083 = vpack.c.bf16 %v1063, %v1063
        %v1084 = vpack.c.bf16 %v1064, %v1064
        %v1085 = vpack.c.bf16 %v1065, %v1065
        %v1086 = vpack.c.bf16 %v1066, %v1066
        %v1087 = vpack.c.bf16 %v1067, %v1067
        %v1088 = vpack.c.bf16 %v1068, %v1068
        %v1089 = vpack.c.bf16 %v1069, %v1069
        %v1090 = vpack.c.bf16 %v1070, %v1070
        %v1091 = vpack.c.bf16 %v1071, %v1071
        %v1092 = vpack.c.bf16 %v1072, %v1072
        %v1093 = vpack.c.bf16 %v1073, %v1073
        %v1094 = vpack.c.bf16 %v1074, %v1074
        %vm1095 = vcmask 519168
        %1096 = vst.msk [vmem:[#allocation2 + $0x8] sm:$0xf] %vm1095, %v1075
        %1097 = vst.msk [vmem:[#allocation2 + $0xc] sm:$0xf] %vm1095, %v1076
        %1098 = vst.msk [vmem:[#allocation2 + $0x20] sm:$0xf] %vm1095, %v1077
        %1099 = vst.msk [vmem:[#allocation2 + $0x24] sm:$0xf] %vm1095, %v1078
        %1100 = vst.msk [vmem:[#allocation2 + $0x38] sm:$0xf] %vm1095, %v1079
        %1101 = vst.msk [vmem:[#allocation2 + $0x3c] sm:$0xf] %vm1095, %v1080
        %1102 = vst.msk [vmem:[#allocation2 + $0x50] sm:$0xf] %vm1095, %v1081
        %1103 = vst.msk [vmem:[#allocation2 + $0x54] sm:$0xf] %vm1095, %v1082
        %1104 = vst.msk [vmem:[#allocation2 + $0x68] sm:$0xf] %vm1095, %v1083
        %1105 = vst.msk [vmem:[#allocation2 + $0x6c] sm:$0xf] %vm1095, %v1084
        %1106 = vst.msk [vmem:[#allocation2 + $0x80] sm:$0xf] %vm1095, %v1085
        %1107 = vst.msk [vmem:[#allocation2 + $0x84] sm:$0xf] %vm1095, %v1086
        %1108 = vst.msk [vmem:[#allocation2 + $0x98] sm:$0xf] %vm1095, %v1087
        %1109 = vst.msk [vmem:[#allocation2 + $0x9c] sm:$0xf] %vm1095, %v1088
        %1110 = vst.msk [vmem:[#allocation2 + $0xb0] sm:$0xf] %vm1095, %v1089
        %1111 = vst.msk [vmem:[#allocation2 + $0xb4] sm:$0xf] %vm1095, %v1090
        %1112 = vst.msk [vmem:[#allocation2 + $0xc8] sm:$0xf] %vm1095, %v1091
        %1113 = vst.msk [vmem:[#allocation2 + $0xcc] sm:$0xf] %vm1095, %v1092
        %1114 = vst.msk [vmem:[#allocation2 + $0xe0] sm:$0xf] %vm1095, %v1093
        %1115 = vst.msk [vmem:[#allocation2 + $0xe4] sm:$0xf] %vm1095, %v1094
        %vm1116 = vcmask 519171
        %vm1117 = vsmask.f32 7950
        %vm1118 = vmand %vm1116, %vm1117
        %v1119 = vld [vmem:[#allocation2 + $0x4] sm:$0x8]
        %v1120 = vsel %vm1118, 0, %v1119
        %1121 = vst [vmem:[#allocation2 + $0x4] sm:$0x8] %v1120
        %v1122 = vld [vmem:[#allocation2 + $0x1c] sm:$0x8]
        %v1123 = vsel %vm1118, 0, %v1122
        %1124 = vst [vmem:[#allocation2 + $0x1c] sm:$0x8] %v1123
        %v1125 = vld [vmem:[#allocation2 + $0x34] sm:$0x8]
        %v1126 = vsel %vm1118, 0, %v1125
        %1127 = vst [vmem:[#allocation2 + $0x34] sm:$0x8] %v1126
        %v1128 = vld [vmem:[#allocation2 + $0x4c] sm:$0x8]
        %v1129 = vsel %vm1118, 0, %v1128
        %1130 = vst [vmem:[#allocation2 + $0x4c] sm:$0x8] %v1129
        %v1131 = vld [vmem:[#allocation2 + $0x64] sm:$0x8]
        %v1132 = vsel %vm1118, 0, %v1131
        %1133 = vst [vmem:[#allocation2 + $0x64] sm:$0x8] %v1132
        %v1134 = vld [vmem:[#allocation2 + $0x7c] sm:$0x8]
        %v1135 = vsel %vm1118, 0, %v1134
        %1136 = vst [vmem:[#allocation2 + $0x7c] sm:$0x8] %v1135
        %v1137 = vld [vmem:[#allocation2 + $0x94] sm:$0x8]
        %v1138 = vsel %vm1118, 0, %v1137
        %1139 = vst [vmem:[#allocation2 + $0x94] sm:$0x8] %v1138
        %v1140 = vld [vmem:[#allocation2 + $0xac] sm:$0x8]
        %v1141 = vsel %vm1118, 0, %v1140
        %1142 = vst [vmem:[#allocation2 + $0xac] sm:$0x8] %v1141
        %v1143 = vld [vmem:[#allocation2 + $0xc4] sm:$0x8]
        %v1144 = vsel %vm1118, 0, %v1143
        %1145 = vst [vmem:[#allocation2 + $0xc4] sm:$0x8] %v1144
        %v1146 = vld [vmem:[#allocation2 + $0xdc] sm:$0x8]
        %v1147 = vsel %vm1118, 0, %v1146
        %1148 = vst [vmem:[#allocation2 + $0xdc] sm:$0x8] %v1147
        %vm1149 = vcmask 516096
        %vm1150 = vsmask.f32 256
        %vm1151 = vmand %vm1149, %vm1150
        %v1152 = vld [vmem:[#allocation2 + $0x10] sm:$0x1]
        %v1153 = vsel %vm1151, 0, %v1152
        %1154 = vst [vmem:[#allocation2 + $0x10] sm:$0x1] %v1153
        %v1155 = vld [vmem:[#allocation2 + $0x28] sm:$0x1]
        %v1156 = vsel %vm1151, 0, %v1155
        %1157 = vst [vmem:[#allocation2 + $0x28] sm:$0x1] %v1156
        %v1158 = vld [vmem:[#allocation2 + $0x40] sm:$0x1]
        %v1159 = vsel %vm1151, 0, %v1158
        %1160 = vst [vmem:[#allocation2 + $0x40] sm:$0x1] %v1159
        %v1161 = vld [vmem:[#allocation2 + $0x58] sm:$0x1]
        %v1162 = vsel %vm1151, 0, %v1161
        %1163 = vst [vmem:[#allocation2 + $0x58] sm:$0x1] %v1162
        %v1164 = vld [vmem:[#allocation2 + $0x70] sm:$0x1]
        %v1165 = vsel %vm1151, 0, %v1164
        %1166 = vst [vmem:[#allocation2 + $0x70] sm:$0x1] %v1165
        %v1167 = vld [vmem:[#allocation2 + $0x88] sm:$0x1]
        %v1168 = vsel %vm1151, 0, %v1167
        %1169 = vst [vmem:[#allocation2 + $0x88] sm:$0x1] %v1168
        %v1170 = vld [vmem:[#allocation2 + $0xa0] sm:$0x1]
        %v1171 = vsel %vm1151, 0, %v1170
        %1172 = vst [vmem:[#allocation2 + $0xa0] sm:$0x1] %v1171
        %v1173 = vld [vmem:[#allocation2 + $0xb8] sm:$0x1]
        %v1174 = vsel %vm1151, 0, %v1173
        %1175 = vst [vmem:[#allocation2 + $0xb8] sm:$0x1] %v1174
        %v1176 = vld [vmem:[#allocation2 + $0xd0] sm:$0x1]
        %v1177 = vsel %vm1151, 0, %v1176
        %1178 = vst [vmem:[#allocation2 + $0xd0] sm:$0x1] %v1177
        %v1179 = vld [vmem:[#allocation2 + $0xe8] sm:$0x1]
        %v1180 = vsel %vm1151, 0, %v1179
        %1181 = vst [vmem:[#allocation2 + $0xe8] sm:$0x1] %v1180
        %p1182 = scmp.eq.s32.totalorder %s28, 0
        // Predicated region
        $region49: #{tpu_custom_call.1} parent=47 // pred_check
          %p1183 = pneg %p1182
        $region50: #{tpu_custom_call.1} parent=47 // pred_check_branch
          %1185 = sbr.rel (%p1183) target = $region52
        $region51: #{tpu_custom_call.1} parent=47 // pred_region
          %1186 = vst.msk [vmem:[#allocation2 + $0x8] sm:$0xf] %vm1095, 0
          %1187 = vst.msk [vmem:[#allocation2 + $0xc] sm:$0xf] %vm1095, 0
        $region52: #{tpu_custom_call.1} parent=47 // pred_fallthru
          _
        %p1188 = scmp.eq.s32.totalorder %s28, 1
        // Predicated region
        $region53: #{tpu_custom_call.1} parent=47 // pred_check
          %p1189 = pneg %p1188
        $region54: #{tpu_custom_call.1} parent=47 // pred_check_branch
          %1191 = sbr.rel (%p1189) target = $region56
        $region55: #{tpu_custom_call.1} parent=47 // pred_region
          %s1192 = scalar_lea.vmem [#allocation2], 216
          %1193 = vst.msk [vmem:[%s1192 + $0x8] sm:$0xf] %vm1095, 0
          %1194 = vst.msk [vmem:[%s1192 + $0xc] sm:$0xf] %vm1095, 0
        $region56: #{tpu_custom_call.1} parent=47 // pred_fallthru
          _
        %v1195 = vld [vmem:[#allocation2 + $0x4] sm:$0x8]
        %v1196 = vld [vmem:[#allocation2 + $0x8] sm:$0xf]
        %v1197 = vld [vmem:[#allocation2 + $0xc] sm:$0xf]
        %v1198 = vld [vmem:[#allocation2 + $0x1c] sm:$0x8]
        %v1199 = vld [vmem:[#allocation2 + $0x20] sm:$0xf]
        %v1200 = vld [vmem:[#allocation2 + $0x24] sm:$0xf]
        %v1201 = vld [vmem:[#allocation2 + $0x34] sm:$0x8]
        %v1202 = vld [vmem:[#allocation2 + $0x38] sm:$0xf]
        %v1203 = vld [vmem:[#allocation2 + $0x3c] sm:$0xf]
        %v1204 = vld [vmem:[#allocation2 + $0x4c] sm:$0x8]
        %v1205 = vld [vmem:[#allocation2 + $0x50] sm:$0xf]
        %v1206 = vld [vmem:[#allocation2 + $0x54] sm:$0xf]
        %v1207 = vld [vmem:[#allocation2 + $0x64] sm:$0x8]
        %v1208 = vld [vmem:[#allocation2 + $0x68] sm:$0xf]
        %v1209 = vld [vmem:[#allocation2 + $0x6c] sm:$0xf]
        %v1210 = vld [vmem:[#allocation2 + $0x7c] sm:$0x8]
        %v1211 = vld [vmem:[#allocation2 + $0x80] sm:$0xf]
        %v1212 = vld [vmem:[#allocation2 + $0x84] sm:$0xf]
        %v1213 = vld [vmem:[#allocation2 + $0x94] sm:$0x8]
        %v1214 = vld [vmem:[#allocation2 + $0x98] sm:$0xf]
        %v1215 = vld [vmem:[#allocation2 + $0x9c] sm:$0xf]
        %v1216 = vld [vmem:[#allocation2 + $0xac] sm:$0x8]
        %v1217 = vld [vmem:[#allocation2 + $0xb0] sm:$0xf]
        %v1218 = vld [vmem:[#allocation2 + $0xb4] sm:$0xf]
        %v1219 = vld [vmem:[#allocation2 + $0xc4] sm:$0x8]
        %v1220 = vld [vmem:[#allocation2 + $0xc8] sm:$0xf]
        %v1221 = vld [vmem:[#allocation2 + $0xcc] sm:$0xf]
        %v1222 = vld [vmem:[#allocation2 + $0xdc] sm:$0x8]
        %v1223 = vld [vmem:[#allocation2 + $0xe0] sm:$0xf]
        %v1224 = vld [vmem:[#allocation2 + $0xe4] sm:$0xf]
        %vm1225 = vsmask.f32 4368
        %vm1226 = vmor %vm1150, %vm1225
        %v1228 = vshrl.u32 %v1195, 16
        %v1230 = vrot.slane %v1228, 7
        %v1231 = vrot.slane %v1230, 4
        %v1233 = vshrl.u32 %v1196, 16
        %v1235 = vrot.slane %v1233, 7
        %v1236 = vshll.u32 %v1196, 16
        %v1238 = vor.u32 %v1235, %v1236
        %v1239 = vsel %vm1226, %v1231, %v1238
        %v1240 = vrot.slane %v1235, 4
        %v1242 = vshrl.u32 %v1197, 16
        %v1244 = vrot.slane %v1242, 7
        %v1245 = vshll.u32 %v1197, 16
        %v1247 = vor.u32 %v1244, %v1245
        %v1248 = vsel %vm1226, %v1240, %v1247
        %v1250 = vshrl.u32 %v1198, 16
        %v1252 = vrot.slane %v1250, 7
        %v1253 = vrot.slane %v1252, 4
        %v1255 = vshrl.u32 %v1199, 16
        %v1257 = vrot.slane %v1255, 7
        %v1258 = vshll.u32 %v1199, 16
        %v1260 = vor.u32 %v1257, %v1258
        %v1261 = vsel %vm1226, %v1253, %v1260
        %v1262 = vrot.slane %v1257, 4
        %v1264 = vshrl.u32 %v1200, 16
        %v1266 = vrot.slane %v1264, 7
        %v1267 = vshll.u32 %v1200, 16
        %v1269 = vor.u32 %v1266, %v1267
        %v1270 = vsel %vm1226, %v1262, %v1269
        %v1272 = vshrl.u32 %v1201, 16
        %v1274 = vrot.slane %v1272, 7
        %v1275 = vrot.slane %v1274, 4
        %v1277 = vshrl.u32 %v1202, 16
        %v1279 = vrot.slane %v1277, 7
        %v1280 = vshll.u32 %v1202, 16
        %v1282 = vor.u32 %v1279, %v1280
        %v1283 = vsel %vm1226, %v1275, %v1282
        %v1284 = vrot.slane %v1279, 4
        %v1286 = vshrl.u32 %v1203, 16
        %v1288 = vrot.slane %v1286, 7
        %v1289 = vshll.u32 %v1203, 16
        %v1291 = vor.u32 %v1288, %v1289
        %v1292 = vsel %vm1226, %v1284, %v1291
        %v1294 = vshrl.u32 %v1204, 16
        %v1296 = vrot.slane %v1294, 7
        %v1297 = vrot.slane %v1296, 4
        %v1299 = vshrl.u32 %v1205, 16
        %v1301 = vrot.slane %v1299, 7
        %v1302 = vshll.u32 %v1205, 16
        %v1304 = vor.u32 %v1301, %v1302
        %v1305 = vsel %vm1226, %v1297, %v1304
        %v1306 = vrot.slane %v1301, 4
        %v1308 = vshrl.u32 %v1206, 16
        %v1310 = vrot.slane %v1308, 7
        %v1311 = vshll.u32 %v1206, 16
        %v1313 = vor.u32 %v1310, %v1311
        %v1314 = vsel %vm1226, %v1306, %v1313
        %v1316 = vshrl.u32 %v1207, 16
        %v1318 = vrot.slane %v1316, 7
        %v1319 = vrot.slane %v1318, 4
        %v1321 = vshrl.u32 %v1208, 16
        %v1323 = vrot.slane %v1321, 7
        %v1324 = vshll.u32 %v1208, 16
        %v1326 = vor.u32 %v1323, %v1324
        %v1327 = vsel %vm1226, %v1319, %v1326
        %v1328 = vrot.slane %v1323, 4
        %v1330 = vshrl.u32 %v1209, 16
        %v1332 = vrot.slane %v1330, 7
        %v1333 = vshll.u32 %v1209, 16
        %v1335 = vor.u32 %v1332, %v1333
        %v1336 = vsel %vm1226, %v1328, %v1335
        %v1338 = vshrl.u32 %v1210, 16
        %v1340 = vrot.slane %v1338, 7
        %v1341 = vrot.slane %v1340, 4
        %v1343 = vshrl.u32 %v1211, 16
        %v1345 = vrot.slane %v1343, 7
        %v1346 = vshll.u32 %v1211, 16
        %v1348 = vor.u32 %v1345, %v1346
        %v1349 = vsel %vm1226, %v1341, %v1348
        %v1350 = vrot.slane %v1345, 4
        %v1352 = vshrl.u32 %v1212, 16
        %v1354 = vrot.slane %v1352, 7
        %v1355 = vshll.u32 %v1212, 16
        %v1357 = vor.u32 %v1354, %v1355
        %v1358 = vsel %vm1226, %v1350, %v1357
        %v1360 = vshrl.u32 %v1213, 16
        %v1362 = vrot.slane %v1360, 7
        %v1363 = vrot.slane %v1362, 4
        %v1365 = vshrl.u32 %v1214, 16
        %v1367 = vrot.slane %v1365, 7
        %v1368 = vshll.u32 %v1214, 16
        %v1370 = vor.u32 %v1367, %v1368
        %v1371 = vsel %vm1226, %v1363, %v1370
        %v1372 = vrot.slane %v1367, 4
        %v1374 = vshrl.u32 %v1215, 16
        %v1376 = vrot.slane %v1374, 7
        %v1377 = vshll.u32 %v1215, 16
        %v1379 = vor.u32 %v1376, %v1377
        %v1380 = vsel %vm1226, %v1372, %v1379
        %v1382 = vshrl.u32 %v1216, 16
        %v1384 = vrot.slane %v1382, 7
        %v1385 = vrot.slane %v1384, 4
        %v1387 = vshrl.u32 %v1217, 16
        %v1389 = vrot.slane %v1387, 7
        %v1390 = vshll.u32 %v1217, 16
        %v1392 = vor.u32 %v1389, %v1390
        %v1393 = vsel %vm1226, %v1385, %v1392
        %v1394 = vrot.slane %v1389, 4
        %v1396 = vshrl.u32 %v1218, 16
        %v1398 = vrot.slane %v1396, 7
        %v1399 = vshll.u32 %v1218, 16
        %v1401 = vor.u32 %v1398, %v1399
        %v1402 = vsel %vm1226, %v1394, %v1401
        %v1403 = vld [vmem:[%s3] sm:$0xf]
        %v1404 = vld [vmem:[%s3 + $0x4] sm:$0xf]
        %v1405 = vld [vmem:[%s3 + $0x8] sm:$0xf]
        %v1406 = vld [vmem:[%s3 + $0xc] sm:$0xf]
        %v1407 = vld [vmem:[%s3 + $0x10] sm:$0xf]
        %v1408 = vld [vmem:[%s3 + $0x14] sm:$0xf]
        %v1409 = vld [vmem:[%s3 + $0x18] sm:$0xf]
        %v1410 = vld [vmem:[%s3 + $0x1c] sm:$0xf]
        %v1412 = vshrl.u32 %v1219, 16
        %v1414 = vrot.slane %v1412, 7
        %v1415 = vrot.slane %v1414, 4
        %v1417 = vshrl.u32 %v1220, 16
        %v1419 = vrot.slane %v1417, 7
        %v1420 = vshll.u32 %v1220, 16
        %v1422 = vor.u32 %v1419, %v1420
        %v1423 = vsel %vm1226, %v1415, %v1422
        %v1424 = vrot.slane %v1419, 4
        %v1426 = vshrl.u32 %v1221, 16
        %v1428 = vrot.slane %v1426, 7
        %v1429 = vshll.u32 %v1221, 16
        %v1431 = vor.u32 %v1428, %v1429
        %v1432 = vsel %vm1226, %v1424, %v1431
        %s1433 = scalar_lea.vmem %s3, 96
        %v1434 = vld [vmem:[%s1433] sm:$0xf]
        %v1435 = vld [vmem:[%s1433 + $0x4] sm:$0xf]
        %v1436 = vld [vmem:[%s1433 + $0x8] sm:$0xf]
        %v1437 = vld [vmem:[%s1433 + $0xc] sm:$0xf]
        %v1438 = vld [vmem:[%s1433 + $0x10] sm:$0xf]
        %v1439 = vld [vmem:[%s1433 + $0x14] sm:$0xf]
        %v1440 = vld [vmem:[%s1433 + $0x18] sm:$0xf]
        %v1441 = vld [vmem:[%s1433 + $0x1c] sm:$0xf]
        %v1442 = vunpack.c.l.b16 %v1261
        %v1443 = vunpack.c.l.b16 %v1270
        %v1444 = vunpack.c.l.b16 %v1283
        %v1445 = vunpack.c.l.b16 %v1292
        %v1446 = vunpack.c.l.b16 %v1305
        %v1447 = vunpack.c.l.b16 %v1314
        %v1448 = vunpack.c.l.b16 %v1327
        %v1449 = vunpack.c.l.b16 %v1336
        %v1450 = vunpack.c.l.b16 %v1349
        %v1451 = vunpack.c.l.b16 %v1358
        %v1452 = vunpack.c.l.b16 %v1371
        %v1453 = vunpack.c.l.b16 %v1380
        %v1454 = vunpack.c.l.b16 %v1393
        %v1455 = vunpack.c.l.b16 %v1402
        %v1456 = vunpack.c.l.b16 %v1423
        %v1457 = vunpack.c.l.b16 %v1432
        %v1458 = vpack.c.b16 %v1443, %v1442
        %v1459 = vpack.c.b16 %v1445, %v1444
        %v1460 = vpack.c.b16 %v1447, %v1446
        %v1461 = vpack.c.b16 %v1449, %v1448
        %v1462 = vpack.c.b16 %v1451, %v1450
        %v1463 = vpack.c.b16 %v1453, %v1452
        %v1464 = vpack.c.b16 %v1455, %v1454
        %v1465 = vpack.c.b16 %v1457, %v1456
        %v1474 = vunpack.c.l.b16 %v1434
        %v1475 = vunpack.c.l.b16 %v1435
        %v1476 = vunpack.c.l.b16 %v1436
        %v1477 = vunpack.c.l.b16 %v1437
        %v1478 = vunpack.c.l.b16 %v1438
        %v1479 = vunpack.c.l.b16 %v1439
        %v1480 = vunpack.c.l.b16 %v1440
        %v1481 = vunpack.c.l.b16 %v1441
        %v1482 = vpack.c.b16 %v1475, %v1474
        %v1483 = vpack.c.b16 %v1477, %v1476
        %v1484 = vpack.c.b16 %v1479, %v1478
        %v1485 = vpack.c.b16 %v1481, %v1480
        %vm1490 = vcmask 523264
        %v1492 = vsel %vm1490, %v1458, 0
        %v1495 = vsel %vm1490, %v1459, 0
        %v1498 = vsel %vm1490, %v1460, 0
        %v1501 = vsel %vm1490, %v1461, 0
        %v1504 = vsel %vm1490, %v1462, 0
        %v1507 = vsel %vm1490, %v1463, 0
        %v1510 = vsel %vm1490, %v1464, 0
        %v1513 = vsel %vm1490, %v1465, 0
        %1515 = vmatpush.bf16.msra.mxu0 0
        %1516 = vmatpush.bf16.msra.mxu0 0
        %1517 = vmatpush.bf16.msra.mxu0 0
        %1518 = vmatpush.bf16.msra.mxu0 0
        %1519 = vmatpush.bf16.msra.mxu0 %v1485
        %1520 = vmatpush.bf16.msra.mxu0 %v1484
        %1521 = vmatpush.bf16.msra.mxu0 %v1483
        %1522 = vmatpush.bf16.msra.mxu0 %v1482
        %1523 = vmatmul.bf16.gmra.mxu0 %v1492
        %v1524 = vpop.f32.mrf.mxu0
        %v1525 = vadd.f32 0.0, %v1524
        %v1526 = vpop.f32.mrf.mxu0
        %v1527 = vadd.f32 0.0, %v1526
        %1528 = vmatmul.bf16.gmra.mxu0 %v1495
        %v1529 = vpop.f32.mrf.mxu0
        %v1530 = vadd.f32 0.0, %v1529
        %v1531 = vpop.f32.mrf.mxu0
        %v1532 = vadd.f32 0.0, %v1531
        %1533 = vmatmul.bf16.gmra.mxu0 %v1498
        %v1534 = vpop.f32.mrf.mxu0
        %v1535 = vadd.f32 0.0, %v1534
        %v1536 = vpop.f32.mrf.mxu0
        %v1537 = vadd.f32 0.0, %v1536
        %1538 = vmatmul.bf16.gmra.mxu0 %v1501
        %v1539 = vpop.f32.mrf.mxu0
        %v1540 = vadd.f32 0.0, %v1539
        %v1541 = vpop.f32.mrf.mxu0
        %v1542 = vadd.f32 0.0, %v1541
        %1543 = vmatmul.bf16.gmra.mxu0 %v1504
        %v1544 = vpop.f32.mrf.mxu0
        %v1545 = vadd.f32 0.0, %v1544
        %v1546 = vpop.f32.mrf.mxu0
        %v1547 = vadd.f32 0.0, %v1546
        %1548 = vmatmul.bf16.gmra.mxu0 %v1507
        %v1549 = vpop.f32.mrf.mxu0
        %v1550 = vadd.f32 0.0, %v1549
        %v1551 = vpop.f32.mrf.mxu0
        %v1552 = vadd.f32 0.0, %v1551
        %1553 = vmatmul.bf16.gmra.mxu0 %v1510
        %v1554 = vpop.f32.mrf.mxu0
        %v1555 = vadd.f32 0.0, %v1554
        %v1556 = vpop.f32.mrf.mxu0
        %v1557 = vadd.f32 0.0, %v1556
        %1558 = vmatmul.bf16.gmra.mxu0 %v1513
        %v1559 = vpop.f32.mrf.mxu0
        %v1560 = vadd.f32 0.0, %v1559
        %v1561 = vpop.f32.mrf.mxu0
        %v1562 = vadd.f32 0.0, %v1561
        %1563 = vdwg.mxu0
        %v1564 = vunpack.c.l.b16 %v1239
        %v1565 = vunpack.c.l.b16 %v1248
        %v1566 = vpack.c.b16 %v1565, %v1564
        %v1575 = vunpack.c.l.b16 %v1403
        %v1576 = vunpack.c.l.b16 %v1404
        %v1577 = vunpack.c.l.b16 %v1405
        %v1578 = vunpack.c.l.b16 %v1406
        %v1579 = vunpack.c.l.b16 %v1407
        %v1580 = vunpack.c.l.b16 %v1408
        %v1581 = vunpack.c.l.b16 %v1409
        %v1582 = vunpack.c.l.b16 %v1410
        %v1583 = vpack.c.b16 %v1576, %v1575
        %v1584 = vpack.c.b16 %v1578, %v1577
        %v1585 = vpack.c.b16 %v1580, %v1579
        %v1586 = vpack.c.b16 %v1582, %v1581
        %v1592 = vsel %vm1490, %v1566, 0
        %1594 = vmatpush.bf16.msra.mxu0 0
        %1595 = vmatpush.bf16.msra.mxu0 0
        %1596 = vmatpush.bf16.msra.mxu0 0
        %1597 = vmatpush.bf16.msra.mxu0 0
        %1598 = vmatpush.bf16.msra.mxu0 %v1586
        %1599 = vmatpush.bf16.msra.mxu0 %v1585
        %1600 = vmatpush.bf16.msra.mxu0 %v1584
        %1601 = vmatpush.bf16.msra.mxu0 %v1583
        %1602 = vmatmul.bf16.gmra.mxu0 %v1592
        %v1603 = vpop.f32.mrf.mxu0
        %v1604 = vadd.f32 %v1525, %v1603
        %v1605 = vpop.f32.mrf.mxu0
        %v1606 = vadd.f32 %v1527, %v1605
        %1607 = vmatmul.bf16.gmra.mxu0 %v1492
        %v1608 = vpop.f32.mrf.mxu0
        %v1609 = vadd.f32 %v1530, %v1608
        %v1610 = vpop.f32.mrf.mxu0
        %v1611 = vadd.f32 %v1532, %v1610
        %1612 = vmatmul.bf16.gmra.mxu0 %v1495
        %v1613 = vpop.f32.mrf.mxu0
        %v1614 = vadd.f32 %v1535, %v1613
        %v1615 = vpop.f32.mrf.mxu0
        %v1616 = vadd.f32 %v1537, %v1615
        %1617 = vmatmul.bf16.gmra.mxu0 %v1498
        %v1618 = vpop.f32.mrf.mxu0
        %v1619 = vadd.f32 %v1540, %v1618
        %v1620 = vpop.f32.mrf.mxu0
        %v1621 = vadd.f32 %v1542, %v1620
        %1622 = vmatmul.bf16.gmra.mxu0 %v1501
        %v1623 = vpop.f32.mrf.mxu0
        %v1624 = vadd.f32 %v1545, %v1623
        %v1625 = vpop.f32.mrf.mxu0
        %v1626 = vadd.f32 %v1547, %v1625
        %1627 = vmatmul.bf16.gmra.mxu0 %v1504
        %v1628 = vpop.f32.mrf.mxu0
        %v1629 = vadd.f32 %v1550, %v1628
        %v1630 = vpop.f32.mrf.mxu0
        %v1631 = vadd.f32 %v1552, %v1630
        %1632 = vmatmul.bf16.gmra.mxu0 %v1507
        %v1633 = vpop.f32.mrf.mxu0
        %v1634 = vadd.f32 %v1555, %v1633
        %v1635 = vpop.f32.mrf.mxu0
        %v1636 = vadd.f32 %v1557, %v1635
        %1637 = vmatmul.bf16.gmra.mxu0 %v1510
        %v1638 = vpop.f32.mrf.mxu0
        %v1639 = vadd.f32 %v1560, %v1638
        %v1640 = vpop.f32.mrf.mxu0
        %v1641 = vadd.f32 %v1562, %v1640
        %1642 = vdwg.mxu0
        %v1644 = vshrl.u32 %v1222, 16
        %v1646 = vrot.slane %v1644, 7
        %v1647 = vrot.slane %v1646, 4
        %v1649 = vshrl.u32 %v1223, 16
        %v1651 = vrot.slane %v1649, 7
        %v1652 = vshll.u32 %v1223, 16
        %v1654 = vor.u32 %v1651, %v1652
        %v1655 = vsel %vm1226, %v1647, %v1654
        %v1656 = vrot.slane %v1651, 4
        %v1658 = vshrl.u32 %v1224, 16
        %v1660 = vrot.slane %v1658, 7
        %v1661 = vshll.u32 %v1224, 16
        %v1663 = vor.u32 %v1660, %v1661
        %v1664 = vsel %vm1226, %v1656, %v1663
        %s1665 = scalar_lea.vmem %s3, 192
        %v1666 = vld [vmem:[%s1665] sm:$0xf]
        %v1667 = vld [vmem:[%s1665 + $0x4] sm:$0xf]
        %v1668 = vld [vmem:[%s1665 + $0x8] sm:$0xf]
        %v1669 = vld [vmem:[%s1665 + $0xc] sm:$0xf]
        %v1670 = vld [vmem:[%s1665 + $0x10] sm:$0xf]
        %v1671 = vld [vmem:[%s1665 + $0x14] sm:$0xf]
        %v1672 = vld [vmem:[%s1665 + $0x18] sm:$0xf]
        %v1673 = vld [vmem:[%s1665 + $0x1c] sm:$0xf]
        %v1674 = vunpack.c.l.b16 %v1655
        %v1675 = vunpack.c.l.b16 %v1664
        %v1676 = vpack.c.b16 %v1675, %v1674
        %v1685 = vunpack.c.l.b16 %v1666
        %v1686 = vunpack.c.l.b16 %v1667
        %v1687 = vunpack.c.l.b16 %v1668
        %v1688 = vunpack.c.l.b16 %v1669
        %v1689 = vunpack.c.l.b16 %v1670
        %v1690 = vunpack.c.l.b16 %v1671
        %v1691 = vunpack.c.l.b16 %v1672
        %v1692 = vunpack.c.l.b16 %v1673
        %v1693 = vpack.c.b16 %v1686, %v1685
        %v1694 = vpack.c.b16 %v1688, %v1687
        %v1695 = vpack.c.b16 %v1690, %v1689
        %v1696 = vpack.c.b16 %v1692, %v1691
        %v1702 = vsel %vm1490, %v1676, 0
        %1704 = vmatpush.bf16.msra.mxu0 0
        %1705 = vmatpush.bf16.msra.mxu0 0
        %1706 = vmatpush.bf16.msra.mxu0 0
        %1707 = vmatpush.bf16.msra.mxu0 0
        %1708 = vmatpush.bf16.msra.mxu0 %v1696
        %1709 = vmatpush.bf16.msra.mxu0 %v1695
        %1710 = vmatpush.bf16.msra.mxu0 %v1694
        %1711 = vmatpush.bf16.msra.mxu0 %v1693
        %1712 = vmatmul.bf16.gmra.mxu0 %v1495
        %v1713 = vpop.f32.mrf.mxu0
        %v1714 = vadd.f32 0.0, %v1713
        %v1715 = vpop.f32.mrf.mxu0
        %v1716 = vadd.f32 0.0, %v1715
        %1717 = vmatmul.bf16.gmra.mxu0 %v1498
        %v1718 = vpop.f32.mrf.mxu0
        %v1719 = vadd.f32 0.0, %v1718
        %v1720 = vpop.f32.mrf.mxu0
        %v1721 = vadd.f32 0.0, %v1720
        %1722 = vmatmul.bf16.gmra.mxu0 %v1501
        %v1723 = vpop.f32.mrf.mxu0
        %v1724 = vadd.f32 0.0, %v1723
        %v1725 = vpop.f32.mrf.mxu0
        %v1726 = vadd.f32 0.0, %v1725
        %1727 = vmatmul.bf16.gmra.mxu0 %v1504
        %v1728 = vpop.f32.mrf.mxu0
        %v1729 = vadd.f32 0.0, %v1728
        %v1730 = vpop.f32.mrf.mxu0
        %v1731 = vadd.f32 0.0, %v1730
        %1732 = vmatmul.bf16.gmra.mxu0 %v1507
        %v1733 = vpop.f32.mrf.mxu0
        %v1734 = vadd.f32 0.0, %v1733
        %v1735 = vpop.f32.mrf.mxu0
        %v1736 = vadd.f32 0.0, %v1735
        %1737 = vmatmul.bf16.gmra.mxu0 %v1510
        %v1738 = vpop.f32.mrf.mxu0
        %v1739 = vadd.f32 0.0, %v1738
        %v1740 = vpop.f32.mrf.mxu0
        %v1741 = vadd.f32 0.0, %v1740
        %1742 = vmatmul.bf16.gmra.mxu0 %v1513
        %v1743 = vpop.f32.mrf.mxu0
        %v1744 = vadd.f32 0.0, %v1743
        %v1745 = vpop.f32.mrf.mxu0
        %v1746 = vadd.f32 0.0, %v1745
        %1747 = vmatmul.bf16.gmra.mxu0 %v1702
        %v1748 = vpop.f32.mrf.mxu0
        %v1749 = vadd.f32 0.0, %v1748
        %v1750 = vpop.f32.mrf.mxu0
        %v1751 = vadd.f32 0.0, %v1750
        %1752 = vdwg.mxu0
        %v1753 = vadd.f32 %v1604, %v1714
        %v1754 = vadd.f32 %v1606, %v1716
        %v1755 = vadd.f32 %v1609, %v1719
        %v1756 = vadd.f32 %v1611, %v1721
        %v1757 = vadd.f32 %v1614, %v1724
        %v1758 = vadd.f32 %v1616, %v1726
        %v1759 = vadd.f32 %v1619, %v1729
        %v1760 = vadd.f32 %v1621, %v1731
        %v1761 = vadd.f32 %v1624, %v1734
        %v1762 = vadd.f32 %v1626, %v1736
        %v1763 = vadd.f32 %v1629, %v1739
        %v1764 = vadd.f32 %v1631, %v1741
        %v1765 = vadd.f32 %v1634, %v1744
        %v1766 = vadd.f32 %v1636, %v1746
        %v1767 = vadd.f32 %v1639, %v1749
        %v1768 = vadd.f32 %v1641, %v1751
        %s1769 = scalar_lea.vmem %s3, 32
        %v1770 = vld [vmem:[%s1769] sm:$0xf]
        %v1771 = vld [vmem:[%s1769 + $0x4] sm:$0xf]
        %v1772 = vld [vmem:[%s1769 + $0x8] sm:$0xf]
        %v1773 = vld [vmem:[%s1769 + $0xc] sm:$0xf]
        %v1774 = vld [vmem:[%s1769 + $0x10] sm:$0xf]
        %v1775 = vld [vmem:[%s1769 + $0x14] sm:$0xf]
        %v1776 = vld [vmem:[%s1769 + $0x18] sm:$0xf]
        %v1777 = vld [vmem:[%s1769 + $0x1c] sm:$0xf]
        %v1794 = vunpack.c.l.b16 %v1196
        %v1795 = vunpack.c.l.b16 %v1197
        %v1796 = vunpack.c.l.b16 %v1199
        %v1797 = vunpack.c.l.b16 %v1200
        %v1798 = vunpack.c.l.b16 %v1202
        %v1799 = vunpack.c.l.b16 %v1203
        %v1800 = vunpack.c.l.b16 %v1205
        %v1801 = vunpack.c.l.b16 %v1206
        %v1802 = vunpack.c.l.b16 %v1208
        %v1803 = vunpack.c.l.b16 %v1209
        %v1804 = vunpack.c.l.b16 %v1211
        %v1805 = vunpack.c.l.b16 %v1212
        %v1806 = vunpack.c.l.b16 %v1214
        %v1807 = vunpack.c.l.b16 %v1215
        %v1808 = vunpack.c.l.b16 %v1217
        %v1809 = vunpack.c.l.b16 %v1218
        %v1810 = vpack.c.b16 %v1795, %v1794
        %v1811 = vpack.c.b16 %v1797, %v1796
        %v1812 = vpack.c.b16 %v1799, %v1798
        %v1813 = vpack.c.b16 %v1801, %v1800
        %v1814 = vpack.c.b16 %v1803, %v1802
        %v1815 = vpack.c.b16 %v1805, %v1804
        %v1816 = vpack.c.b16 %v1807, %v1806
        %v1817 = vpack.c.b16 %v1809, %v1808
        %v1826 = vunpack.c.l.b16 %v1770
        %v1827 = vunpack.c.l.b16 %v1771
        %v1828 = vunpack.c.l.b16 %v1772
        %v1829 = vunpack.c.l.b16 %v1773
        %v1830 = vunpack.c.l.b16 %v1774
        %v1831 = vunpack.c.l.b16 %v1775
        %v1832 = vunpack.c.l.b16 %v1776
        %v1833 = vunpack.c.l.b16 %v1777
        %v1834 = vpack.c.b16 %v1827, %v1826
        %v1835 = vpack.c.b16 %v1829, %v1828
        %v1836 = vpack.c.b16 %v1831, %v1830
        %v1837 = vpack.c.b16 %v1833, %v1832
        %v1843 = vsel %vm1490, %v1810, 0
        %v1846 = vsel %vm1490, %v1811, 0
        %v1849 = vsel %vm1490, %v1812, 0
        %v1852 = vsel %vm1490, %v1813, 0
        %v1855 = vsel %vm1490, %v1814, 0
        %v1858 = vsel %vm1490, %v1815, 0
        %v1861 = vsel %vm1490, %v1816, 0
        %v1864 = vsel %vm1490, %v1817, 0
        %1866 = vmatpush.bf16.msra.mxu0 0
        %1867 = vmatpush.bf16.msra.mxu0 0
        %1868 = vmatpush.bf16.msra.mxu0 0
        %1869 = vmatpush.bf16.msra.mxu0 0
        %1870 = vmatpush.bf16.msra.mxu0 %v1837
        %1871 = vmatpush.bf16.msra.mxu0 %v1836
        %1872 = vmatpush.bf16.msra.mxu0 %v1835
        %1873 = vmatpush.bf16.msra.mxu0 %v1834
        %1874 = vmatmul.bf16.gmra.mxu0 %v1843
        %v1875 = vpop.f32.mrf.mxu0
        %v1876 = vadd.f32 0.0, %v1875
        %v1877 = vpop.f32.mrf.mxu0
        %v1878 = vadd.f32 0.0, %v1877
        %1879 = vmatmul.bf16.gmra.mxu0 %v1846
        %v1880 = vpop.f32.mrf.mxu0
        %v1881 = vadd.f32 0.0, %v1880
        %v1882 = vpop.f32.mrf.mxu0
        %v1883 = vadd.f32 0.0, %v1882
        %1884 = vmatmul.bf16.gmra.mxu0 %v1849
        %v1885 = vpop.f32.mrf.mxu0
        %v1886 = vadd.f32 0.0, %v1885
        %v1887 = vpop.f32.mrf.mxu0
        %v1888 = vadd.f32 0.0, %v1887
        %1889 = vmatmul.bf16.gmra.mxu0 %v1852
        %v1890 = vpop.f32.mrf.mxu0
        %v1891 = vadd.f32 0.0, %v1890
        %v1892 = vpop.f32.mrf.mxu0
        %v1893 = vadd.f32 0.0, %v1892
        %1894 = vmatmul.bf16.gmra.mxu0 %v1855
        %v1895 = vpop.f32.mrf.mxu0
        %v1896 = vadd.f32 0.0, %v1895
        %v1897 = vpop.f32.mrf.mxu0
        %v1898 = vadd.f32 0.0, %v1897
        %1899 = vmatmul.bf16.gmra.mxu0 %v1858
        %v1900 = vpop.f32.mrf.mxu0
        %v1901 = vadd.f32 0.0, %v1900
        %v1902 = vpop.f32.mrf.mxu0
        %v1903 = vadd.f32 0.0, %v1902
        %1904 = vmatmul.bf16.gmra.mxu0 %v1861
        %v1905 = vpop.f32.mrf.mxu0
        %v1906 = vadd.f32 0.0, %v1905
        %v1907 = vpop.f32.mrf.mxu0
        %v1908 = vadd.f32 0.0, %v1907
        %1909 = vmatmul.bf16.gmra.mxu0 %v1864
        %v1910 = vpop.f32.mrf.mxu0
        %v1911 = vadd.f32 0.0, %v1910
        %v1912 = vpop.f32.mrf.mxu0
        %v1913 = vadd.f32 0.0, %v1912
        %1914 = vdwg.mxu0
        %v1915 = vadd.f32 %v1753, %v1876
        %v1916 = vadd.f32 %v1754, %v1878
        %v1917 = vadd.f32 %v1755, %v1881
        %v1918 = vadd.f32 %v1756, %v1883
        %v1919 = vadd.f32 %v1757, %v1886
        %v1920 = vadd.f32 %v1758, %v1888
        %v1921 = vadd.f32 %v1759, %v1891
        %v1922 = vadd.f32 %v1760, %v1893
        %v1923 = vadd.f32 %v1761, %v1896
        %v1924 = vadd.f32 %v1762, %v1898
        %v1925 = vadd.f32 %v1763, %v1901
        %v1926 = vadd.f32 %v1764, %v1903
        %v1927 = vadd.f32 %v1765, %v1906
        %v1928 = vadd.f32 %v1766, %v1908
        %v1929 = vadd.f32 %v1767, %v1911
        %v1930 = vadd.f32 %v1768, %v1913
        %s1931 = scalar_lea.vmem %s3, 128
        %v1932 = vld [vmem:[%s1931] sm:$0xf]
        %v1933 = vld [vmem:[%s1931 + $0x4] sm:$0xf]
        %v1934 = vld [vmem:[%s1931 + $0x8] sm:$0xf]
        %v1935 = vld [vmem:[%s1931 + $0xc] sm:$0xf]
        %v1936 = vld [vmem:[%s1931 + $0x10] sm:$0xf]
        %v1937 = vld [vmem:[%s1931 + $0x14] sm:$0xf]
        %v1938 = vld [vmem:[%s1931 + $0x18] sm:$0xf]
        %v1939 = vld [vmem:[%s1931 + $0x1c] sm:$0xf]
        %v1942 = vunpack.c.l.b16 %v1220
        %v1943 = vunpack.c.l.b16 %v1221
        %v1944 = vpack.c.b16 %v1943, %v1942
        %v1953 = vunpack.c.l.b16 %v1932
        %v1954 = vunpack.c.l.b16 %v1933
        %v1955 = vunpack.c.l.b16 %v1934
        %v1956 = vunpack.c.l.b16 %v1935
        %v1957 = vunpack.c.l.b16 %v1936
        %v1958 = vunpack.c.l.b16 %v1937
        %v1959 = vunpack.c.l.b16 %v1938
        %v1960 = vunpack.c.l.b16 %v1939
        %v1961 = vpack.c.b16 %v1954, %v1953
        %v1962 = vpack.c.b16 %v1956, %v1955
        %v1963 = vpack.c.b16 %v1958, %v1957
        %v1964 = vpack.c.b16 %v1960, %v1959
        %v1970 = vsel %vm1490, %v1944, 0
        %1972 = vmatpush.bf16.msra.mxu0 0
        %1973 = vmatpush.bf16.msra.mxu0 0
        %1974 = vmatpush.bf16.msra.mxu0 0
        %1975 = vmatpush.bf16.msra.mxu0 0
        %1976 = vmatpush.bf16.msra.mxu0 %v1964
        %1977 = vmatpush.bf16.msra.mxu0 %v1963
        %1978 = vmatpush.bf16.msra.mxu0 %v1962
        %1979 = vmatpush.bf16.msra.mxu0 %v1961
        %1980 = vmatmul.bf16.gmra.mxu0 %v1846
        %v1981 = vpop.f32.mrf.mxu0
        %v1982 = vadd.f32 0.0, %v1981
        %v1983 = vpop.f32.mrf.mxu0
        %v1984 = vadd.f32 0.0, %v1983
        %1985 = vmatmul.bf16.gmra.mxu0 %v1849
        %v1986 = vpop.f32.mrf.mxu0
        %v1987 = vadd.f32 0.0, %v1986
        %v1988 = vpop.f32.mrf.mxu0
        %v1989 = vadd.f32 0.0, %v1988
        %1990 = vmatmul.bf16.gmra.mxu0 %v1852
        %v1991 = vpop.f32.mrf.mxu0
        %v1992 = vadd.f32 0.0, %v1991
        %v1993 = vpop.f32.mrf.mxu0
        %v1994 = vadd.f32 0.0, %v1993
        %1995 = vmatmul.bf16.gmra.mxu0 %v1855
        %v1996 = vpop.f32.mrf.mxu0
        %v1997 = vadd.f32 0.0, %v1996
        %v1998 = vpop.f32.mrf.mxu0
        %v1999 = vadd.f32 0.0, %v1998
        %2000 = vmatmul.bf16.gmra.mxu0 %v1858
        %v2001 = vpop.f32.mrf.mxu0
        %v2002 = vadd.f32 0.0, %v2001
        %v2003 = vpop.f32.mrf.mxu0
        %v2004 = vadd.f32 0.0, %v2003
        %2005 = vmatmul.bf16.gmra.mxu0 %v1861
        %v2006 = vpop.f32.mrf.mxu0
        %v2007 = vadd.f32 0.0, %v2006
        %v2008 = vpop.f32.mrf.mxu0
        %v2009 = vadd.f32 0.0, %v2008
        %2010 = vmatmul.bf16.gmra.mxu0 %v1864
        %v2011 = vpop.f32.mrf.mxu0
        %v2012 = vadd.f32 0.0, %v2011
        %v2013 = vpop.f32.mrf.mxu0
        %v2014 = vadd.f32 0.0, %v2013
        %2015 = vmatmul.bf16.gmra.mxu0 %v1970
        %v2016 = vpop.f32.mrf.mxu0
        %v2017 = vadd.f32 0.0, %v2016
        %v2018 = vpop.f32.mrf.mxu0
        %v2019 = vadd.f32 0.0, %v2018
        %2020 = vdwg.mxu0
        %v2021 = vadd.f32 %v1915, %v1982
        %v2022 = vadd.f32 %v1916, %v1984
        %v2023 = vadd.f32 %v1917, %v1987
        %v2024 = vadd.f32 %v1918, %v1989
        %v2025 = vadd.f32 %v1919, %v1992
        %v2026 = vadd.f32 %v1920, %v1994
        %v2027 = vadd.f32 %v1921, %v1997
        %v2028 = vadd.f32 %v1922, %v1999
        %v2029 = vadd.f32 %v1923, %v2002
        %v2030 = vadd.f32 %v1924, %v2004
        %v2031 = vadd.f32 %v1925, %v2007
        %v2032 = vadd.f32 %v1926, %v2009
        %v2033 = vadd.f32 %v1927, %v2012
        %v2034 = vadd.f32 %v1928, %v2014
        %v2035 = vadd.f32 %v1929, %v2017
        %v2036 = vadd.f32 %v1930, %v2019
        %s2037 = scalar_lea.vmem %s3, 224
        %v2038 = vld [vmem:[%s2037] sm:$0xf]
        %v2039 = vld [vmem:[%s2037 + $0x4] sm:$0xf]
        %v2040 = vld [vmem:[%s2037 + $0x8] sm:$0xf]
        %v2041 = vld [vmem:[%s2037 + $0xc] sm:$0xf]
        %v2042 = vld [vmem:[%s2037 + $0x10] sm:$0xf]
        %v2043 = vld [vmem:[%s2037 + $0x14] sm:$0xf]
        %v2044 = vld [vmem:[%s2037 + $0x18] sm:$0xf]
        %v2045 = vld [vmem:[%s2037 + $0x1c] sm:$0xf]
        %v2048 = vunpack.c.l.b16 %v1223
        %v2049 = vunpack.c.l.b16 %v1224
        %v2050 = vpack.c.b16 %v2049, %v2048
        %v2059 = vunpack.c.l.b16 %v2038
        %v2060 = vunpack.c.l.b16 %v2039
        %v2061 = vunpack.c.l.b16 %v2040
        %v2062 = vunpack.c.l.b16 %v2041
        %v2063 = vunpack.c.l.b16 %v2042
        %v2064 = vunpack.c.l.b16 %v2043
        %v2065 = vunpack.c.l.b16 %v2044
        %v2066 = vunpack.c.l.b16 %v2045
        %v2067 = vpack.c.b16 %v2060, %v2059
        %v2068 = vpack.c.b16 %v2062, %v2061
        %v2069 = vpack.c.b16 %v2064, %v2063
        %v2070 = vpack.c.b16 %v2066, %v2065
        %v2076 = vsel %vm1490, %v2050, 0
        %2078 = vmatpush.bf16.msra.mxu0 0
        %2079 = vmatpush.bf16.msra.mxu0 0
        %2080 = vmatpush.bf16.msra.mxu0 0
        %2081 = vmatpush.bf16.msra.mxu0 0
        %2082 = vmatpush.bf16.msra.mxu0 %v2070
        %2083 = vmatpush.bf16.msra.mxu0 %v2069
        %2084 = vmatpush.bf16.msra.mxu0 %v2068
        %2085 = vmatpush.bf16.msra.mxu0 %v2067
        %2086 = vmatmul.bf16.gmra.mxu0 %v1849
        %v2087 = vpop.f32.mrf.mxu0
        %v2088 = vadd.f32 0.0, %v2087
        %v2089 = vpop.f32.mrf.mxu0
        %v2090 = vadd.f32 0.0, %v2089
        %2091 = vmatmul.bf16.gmra.mxu0 %v1852
        %v2092 = vpop.f32.mrf.mxu0
        %v2093 = vadd.f32 0.0, %v2092
        %v2094 = vpop.f32.mrf.mxu0
        %v2095 = vadd.f32 0.0, %v2094
        %2096 = vmatmul.bf16.gmra.mxu0 %v1855
        %v2097 = vpop.f32.mrf.mxu0
        %v2098 = vadd.f32 0.0, %v2097
        %v2099 = vpop.f32.mrf.mxu0
        %v2100 = vadd.f32 0.0, %v2099
        %2101 = vmatmul.bf16.gmra.mxu0 %v1858
        %v2102 = vpop.f32.mrf.mxu0
        %v2103 = vadd.f32 0.0, %v2102
        %v2104 = vpop.f32.mrf.mxu0
        %v2105 = vadd.f32 0.0, %v2104
        %2106 = vmatmul.bf16.gmra.mxu0 %v1861
        %v2107 = vpop.f32.mrf.mxu0
        %v2108 = vadd.f32 0.0, %v2107
        %v2109 = vpop.f32.mrf.mxu0
        %v2110 = vadd.f32 0.0, %v2109
        %2111 = vmatmul.bf16.gmra.mxu0 %v1864
        %v2112 = vpop.f32.mrf.mxu0
        %v2113 = vadd.f32 0.0, %v2112
        %v2114 = vpop.f32.mrf.mxu0
        %v2115 = vadd.f32 0.0, %v2114
        %2116 = vmatmul.bf16.gmra.mxu0 %v1970
        %v2117 = vpop.f32.mrf.mxu0
        %v2118 = vadd.f32 0.0, %v2117
        %v2119 = vpop.f32.mrf.mxu0
        %v2120 = vadd.f32 0.0, %v2119
        %2121 = vmatmul.bf16.gmra.mxu0 %v2076
        %v2122 = vpop.f32.mrf.mxu0
        %v2123 = vadd.f32 0.0, %v2122
        %v2124 = vpop.f32.mrf.mxu0
        %v2125 = vadd.f32 0.0, %v2124
        %2126 = vdwg.mxu0
        %v2127 = vadd.f32 %v2021, %v2088
        %v2128 = vadd.f32 %v2022, %v2090
        %v2129 = vadd.f32 %v2023, %v2093
        %v2130 = vadd.f32 %v2024, %v2095
        %v2131 = vadd.f32 %v2025, %v2098
        %v2132 = vadd.f32 %v2026, %v2100
        %v2133 = vadd.f32 %v2027, %v2103
        %v2134 = vadd.f32 %v2028, %v2105
        %v2135 = vadd.f32 %v2029, %v2108
        %v2136 = vadd.f32 %v2030, %v2110
        %v2137 = vadd.f32 %v2031, %v2113
        %v2138 = vadd.f32 %v2032, %v2115
        %v2139 = vadd.f32 %v2033, %v2118
        %v2140 = vadd.f32 %v2034, %v2120
        %v2141 = vadd.f32 %v2035, %v2123
        %v2142 = vadd.f32 %v2036, %v2125
        %v2143 = vld [vmem:[#allocation2 + $0x8] sm:$0xf]
        %v2144 = vld [vmem:[#allocation2 + $0xc] sm:$0xf]
        %v2145 = vld [vmem:[#allocation2 + $0x10] sm:$0x1]
        %v2146 = vld [vmem:[#allocation2 + $0x20] sm:$0xf]
        %v2147 = vld [vmem:[#allocation2 + $0x24] sm:$0xf]
        %v2148 = vld [vmem:[#allocation2 + $0x28] sm:$0x1]
        %v2149 = vld [vmem:[#allocation2 + $0x38] sm:$0xf]
        %v2150 = vld [vmem:[#allocation2 + $0x3c] sm:$0xf]
        %v2151 = vld [vmem:[#allocation2 + $0x40] sm:$0x1]
        %v2152 = vld [vmem:[#allocation2 + $0x50] sm:$0xf]
        %v2153 = vld [vmem:[#allocation2 + $0x54] sm:$0xf]
        %v2154 = vld [vmem:[#allocation2 + $0x58] sm:$0x1]
        %v2155 = vld [vmem:[#allocation2 + $0x68] sm:$0xf]
        %v2156 = vld [vmem:[#allocation2 + $0x6c] sm:$0xf]
        %v2157 = vld [vmem:[#allocation2 + $0x70] sm:$0x1]
        %v2158 = vld [vmem:[#allocation2 + $0x80] sm:$0xf]
        %v2159 = vld [vmem:[#allocation2 + $0x84] sm:$0xf]
        %v2160 = vld [vmem:[#allocation2 + $0x88] sm:$0x1]
        %v2161 = vld [vmem:[#allocation2 + $0x98] sm:$0xf]
        %v2162 = vld [vmem:[#allocation2 + $0x9c] sm:$0xf]
        %v2163 = vld [vmem:[#allocation2 + $0xa0] sm:$0x1]
        %v2164 = vld [vmem:[#allocation2 + $0xb0] sm:$0xf]
        %v2165 = vld [vmem:[#allocation2 + $0xb4] sm:$0xf]
        %v2166 = vld [vmem:[#allocation2 + $0xb8] sm:$0x1]
        %v2167 = vld [vmem:[#allocation2 + $0xc8] sm:$0xf]
        %v2168 = vld [vmem:[#allocation2 + $0xcc] sm:$0xf]
        %v2169 = vld [vmem:[#allocation2 + $0xd0] sm:$0x1]
        %v2170 = vld [vmem:[#allocation2 + $0xe0] sm:$0xf]
        %v2171 = vld [vmem:[#allocation2 + $0xe4] sm:$0xf]
        %v2172 = vld [vmem:[#allocation2 + $0xe8] sm:$0x1]
        %vm2173 = vsmask.f32 3328
        %vm2174 = vsmask.f32 7440
        %vm2175 = vmor %vm2173, %vm2174
        %v2177 = vshrl.u32 %v2143, 16
        %v2179 = vrot.slane %v2177, 4
        %v2180 = vshll.u32 %v2143, 16
        %v2182 = vrot.slane %v2180, 5
        %v2183 = vor.u32 %v2179, %v2182
        %v2184 = vrot.slane %v2183, 4
        %v2186 = vshll.u32 %v2144, 16
        %v2188 = vrot.slane %v2186, 5
        %v2189 = vsel %vm2175, %v2184, %v2188
        %v2190 = vshrl.u32 %v2144, 16
        %v2192 = vrot.slane %v2190, 4
        %v2193 = vor.u32 %v2192, %v2188
        %v2194 = vrot.slane %v2193, 4
        %v2196 = vshll.u32 %v2145, 16
        %v2198 = vrot.slane %v2196, 5
        %v2199 = vsel %vm2175, %v2194, %v2198
        %v2201 = vshrl.u32 %v2146, 16
        %v2203 = vrot.slane %v2201, 4
        %v2204 = vshll.u32 %v2146, 16
        %v2206 = vrot.slane %v2204, 5
        %v2207 = vor.u32 %v2203, %v2206
        %v2208 = vrot.slane %v2207, 4
        %v2210 = vshll.u32 %v2147, 16
        %v2212 = vrot.slane %v2210, 5
        %v2213 = vsel %vm2175, %v2208, %v2212
        %v2214 = vshrl.u32 %v2147, 16
        %v2216 = vrot.slane %v2214, 4
        %v2217 = vor.u32 %v2216, %v2212
        %v2218 = vrot.slane %v2217, 4
        %v2220 = vshll.u32 %v2148, 16
        %v2222 = vrot.slane %v2220, 5
        %v2223 = vsel %vm2175, %v2218, %v2222
        %v2225 = vshrl.u32 %v2149, 16
        %v2227 = vrot.slane %v2225, 4
        %v2228 = vshll.u32 %v2149, 16
        %v2230 = vrot.slane %v2228, 5
        %v2231 = vor.u32 %v2227, %v2230
        %v2232 = vrot.slane %v2231, 4
        %v2234 = vshll.u32 %v2150, 16
        %v2236 = vrot.slane %v2234, 5
        %v2237 = vsel %vm2175, %v2232, %v2236
        %v2238 = vshrl.u32 %v2150, 16
        %v2240 = vrot.slane %v2238, 4
        %v2241 = vor.u32 %v2240, %v2236
        %v2242 = vrot.slane %v2241, 4
        %v2244 = vshll.u32 %v2151, 16
        %v2246 = vrot.slane %v2244, 5
        %v2247 = vsel %vm2175, %v2242, %v2246
        %v2249 = vshrl.u32 %v2152, 16
        %v2251 = vrot.slane %v2249, 4
        %v2252 = vshll.u32 %v2152, 16
        %v2254 = vrot.slane %v2252, 5
        %v2255 = vor.u32 %v2251, %v2254
        %v2256 = vrot.slane %v2255, 4
        %v2258 = vshll.u32 %v2153, 16
        %v2260 = vrot.slane %v2258, 5
        %v2261 = vsel %vm2175, %v2256, %v2260
        %v2262 = vshrl.u32 %v2153, 16
        %v2264 = vrot.slane %v2262, 4
        %v2265 = vor.u32 %v2264, %v2260
        %v2266 = vrot.slane %v2265, 4
        %v2268 = vshll.u32 %v2154, 16
        %v2270 = vrot.slane %v2268, 5
        %v2271 = vsel %vm2175, %v2266, %v2270
        %v2273 = vshrl.u32 %v2155, 16
        %v2275 = vrot.slane %v2273, 4
        %v2276 = vshll.u32 %v2155, 16
        %v2278 = vrot.slane %v2276, 5
        %v2279 = vor.u32 %v2275, %v2278
        %v2280 = vrot.slane %v2279, 4
        %v2282 = vshll.u32 %v2156, 16
        %v2284 = vrot.slane %v2282, 5
        %v2285 = vsel %vm2175, %v2280, %v2284
        %v2286 = vshrl.u32 %v2156, 16
        %v2288 = vrot.slane %v2286, 4
        %v2289 = vor.u32 %v2288, %v2284
        %v2290 = vrot.slane %v2289, 4
        %v2292 = vshll.u32 %v2157, 16
        %v2294 = vrot.slane %v2292, 5
        %v2295 = vsel %vm2175, %v2290, %v2294
        %v2297 = vshrl.u32 %v2158, 16
        %v2299 = vrot.slane %v2297, 4
        %v2300 = vshll.u32 %v2158, 16
        %v2302 = vrot.slane %v2300, 5
        %v2303 = vor.u32 %v2299, %v2302
        %v2304 = vrot.slane %v2303, 4
        %v2306 = vshll.u32 %v2159, 16
        %v2308 = vrot.slane %v2306, 5
        %v2309 = vsel %vm2175, %v2304, %v2308
        %v2310 = vshrl.u32 %v2159, 16
        %v2312 = vrot.slane %v2310, 4
        %v2313 = vor.u32 %v2312, %v2308
        %v2314 = vrot.slane %v2313, 4
        %v2316 = vshll.u32 %v2160, 16
        %v2318 = vrot.slane %v2316, 5
        %v2319 = vsel %vm2175, %v2314, %v2318
        %v2321 = vshrl.u32 %v2161, 16
        %v2323 = vrot.slane %v2321, 4
        %v2324 = vshll.u32 %v2161, 16
        %v2326 = vrot.slane %v2324, 5
        %v2327 = vor.u32 %v2323, %v2326
        %v2328 = vrot.slane %v2327, 4
        %v2330 = vshll.u32 %v2162, 16
        %v2332 = vrot.slane %v2330, 5
        %v2333 = vsel %vm2175, %v2328, %v2332
        %v2334 = vshrl.u32 %v2162, 16
        %v2336 = vrot.slane %v2334, 4
        %v2337 = vor.u32 %v2336, %v2332
        %v2338 = vrot.slane %v2337, 4
        %v2340 = vshll.u32 %v2163, 16
        %v2342 = vrot.slane %v2340, 5
        %v2343 = vsel %vm2175, %v2338, %v2342
        %v2345 = vshrl.u32 %v2164, 16
        %v2347 = vrot.slane %v2345, 4
        %v2348 = vshll.u32 %v2164, 16
        %v2350 = vrot.slane %v2348, 5
        %v2351 = vor.u32 %v2347, %v2350
        %v2352 = vrot.slane %v2351, 4
        %v2354 = vshll.u32 %v2165, 16
        %v2356 = vrot.slane %v2354, 5
        %v2357 = vsel %vm2175, %v2352, %v2356
        %v2358 = vshrl.u32 %v2165, 16
        %v2360 = vrot.slane %v2358, 4
        %v2361 = vor.u32 %v2360, %v2356
        %v2362 = vrot.slane %v2361, 4
        %v2364 = vshll.u32 %v2166, 16
        %v2366 = vrot.slane %v2364, 5
        %v2367 = vsel %vm2175, %v2362, %v2366
        %s2368 = scalar_lea.vmem %s3, 64
        %v2369 = vld [vmem:[%s2368] sm:$0xf]
        %v2370 = vld [vmem:[%s2368 + $0x4] sm:$0xf]
        %v2371 = vld [vmem:[%s2368 + $0x8] sm:$0xf]
        %v2372 = vld [vmem:[%s2368 + $0xc] sm:$0xf]
        %v2373 = vld [vmem:[%s2368 + $0x10] sm:$0xf]
        %v2374 = vld [vmem:[%s2368 + $0x14] sm:$0xf]
        %v2375 = vld [vmem:[%s2368 + $0x18] sm:$0xf]
        %v2376 = vld [vmem:[%s2368 + $0x1c] sm:$0xf]
        %v2377 = vunpack.c.l.b16 %v2189
        %v2378 = vunpack.c.l.b16 %v2199
        %v2379 = vunpack.c.l.b16 %v2213
        %v2380 = vunpack.c.l.b16 %v2223
        %v2381 = vunpack.c.l.b16 %v2237
        %v2382 = vunpack.c.l.b16 %v2247
        %v2383 = vunpack.c.l.b16 %v2261
        %v2384 = vunpack.c.l.b16 %v2271
        %v2385 = vunpack.c.l.b16 %v2285
        %v2386 = vunpack.c.l.b16 %v2295
        %v2387 = vunpack.c.l.b16 %v2309
        %v2388 = vunpack.c.l.b16 %v2319
        %v2389 = vunpack.c.l.b16 %v2333
        %v2390 = vunpack.c.l.b16 %v2343
        %v2391 = vunpack.c.l.b16 %v2357
        %v2392 = vunpack.c.l.b16 %v2367
        %v2393 = vpack.c.b16 %v2378, %v2377
        %v2394 = vpack.c.b16 %v2380, %v2379
        %v2395 = vpack.c.b16 %v2382, %v2381
        %v2396 = vpack.c.b16 %v2384, %v2383
        %v2397 = vpack.c.b16 %v2386, %v2385
        %v2398 = vpack.c.b16 %v2388, %v2387
        %v2399 = vpack.c.b16 %v2390, %v2389
        %v2400 = vpack.c.b16 %v2392, %v2391
        %v2409 = vunpack.c.l.b16 %v2369
        %v2410 = vunpack.c.l.b16 %v2370
        %v2411 = vunpack.c.l.b16 %v2371
        %v2412 = vunpack.c.l.b16 %v2372
        %v2413 = vunpack.c.l.b16 %v2373
        %v2414 = vunpack.c.l.b16 %v2374
        %v2415 = vunpack.c.l.b16 %v2375
        %v2416 = vunpack.c.l.b16 %v2376
        %v2417 = vpack.c.b16 %v2410, %v2409
        %v2418 = vpack.c.b16 %v2412, %v2411
        %v2419 = vpack.c.b16 %v2414, %v2413
        %v2420 = vpack.c.b16 %v2416, %v2415
        %v2426 = vsel %vm1490, %v2393, 0
        %v2429 = vsel %vm1490, %v2394, 0
        %v2432 = vsel %vm1490, %v2395, 0
        %v2435 = vsel %vm1490, %v2396, 0
        %v2438 = vsel %vm1490, %v2397, 0
        %v2441 = vsel %vm1490, %v2398, 0
        %v2444 = vsel %vm1490, %v2399, 0
        %v2447 = vsel %vm1490, %v2400, 0
        %2449 = vmatpush.bf16.msra.mxu0 0
        %2450 = vmatpush.bf16.msra.mxu0 0
        %2451 = vmatpush.bf16.msra.mxu0 0
        %2452 = vmatpush.bf16.msra.mxu0 0
        %2453 = vmatpush.bf16.msra.mxu0 %v2420
        %2454 = vmatpush.bf16.msra.mxu0 %v2419
        %2455 = vmatpush.bf16.msra.mxu0 %v2418
        %2456 = vmatpush.bf16.msra.mxu0 %v2417
        %2457 = vmatmul.bf16.gmra.mxu0 %v2426
        %v2458 = vpop.f32.mrf.mxu0
        %v2459 = vadd.f32 0.0, %v2458
        %v2460 = vpop.f32.mrf.mxu0
        %v2461 = vadd.f32 0.0, %v2460
        %2462 = vmatmul.bf16.gmra.mxu0 %v2429
        %v2463 = vpop.f32.mrf.mxu0
        %v2464 = vadd.f32 0.0, %v2463
        %v2465 = vpop.f32.mrf.mxu0
        %v2466 = vadd.f32 0.0, %v2465
        %2467 = vmatmul.bf16.gmra.mxu0 %v2432
        %v2468 = vpop.f32.mrf.mxu0
        %v2469 = vadd.f32 0.0, %v2468
        %v2470 = vpop.f32.mrf.mxu0
        %v2471 = vadd.f32 0.0, %v2470
        %2472 = vmatmul.bf16.gmra.mxu0 %v2435
        %v2473 = vpop.f32.mrf.mxu0
        %v2474 = vadd.f32 0.0, %v2473
        %v2475 = vpop.f32.mrf.mxu0
        %v2476 = vadd.f32 0.0, %v2475
        %2477 = vmatmul.bf16.gmra.mxu0 %v2438
        %v2478 = vpop.f32.mrf.mxu0
        %v2479 = vadd.f32 0.0, %v2478
        %v2480 = vpop.f32.mrf.mxu0
        %v2481 = vadd.f32 0.0, %v2480
        %2482 = vmatmul.bf16.gmra.mxu0 %v2441
        %v2483 = vpop.f32.mrf.mxu0
        %v2484 = vadd.f32 0.0, %v2483
        %v2485 = vpop.f32.mrf.mxu0
        %v2486 = vadd.f32 0.0, %v2485
        %2487 = vmatmul.bf16.gmra.mxu0 %v2444
        %v2488 = vpop.f32.mrf.mxu0
        %v2489 = vadd.f32 0.0, %v2488
        %v2490 = vpop.f32.mrf.mxu0
        %v2491 = vadd.f32 0.0, %v2490
        %2492 = vmatmul.bf16.gmra.mxu0 %v2447
        %v2493 = vpop.f32.mrf.mxu0
        %v2494 = vadd.f32 0.0, %v2493
        %v2495 = vpop.f32.mrf.mxu0
        %v2496 = vadd.f32 0.0, %v2495
        %2497 = vdwg.mxu0
        %v2498 = vadd.f32 %v2127, %v2459
        %v2499 = vadd.f32 %v2128, %v2461
        %v2500 = vadd.f32 %v2129, %v2464
        %v2501 = vadd.f32 %v2130, %v2466
        %v2502 = vadd.f32 %v2131, %v2469
        %v2503 = vadd.f32 %v2132, %v2471
        %v2504 = vadd.f32 %v2133, %v2474
        %v2505 = vadd.f32 %v2134, %v2476
        %v2506 = vadd.f32 %v2135, %v2479
        %v2507 = vadd.f32 %v2136, %v2481
        %v2508 = vadd.f32 %v2137, %v2484
        %v2509 = vadd.f32 %v2138, %v2486
        %v2510 = vadd.f32 %v2139, %v2489
        %v2511 = vadd.f32 %v2140, %v2491
        %v2512 = vadd.f32 %v2141, %v2494
        %v2513 = vadd.f32 %v2142, %v2496
        %v2515 = vshrl.u32 %v2167, 16
        %v2517 = vrot.slane %v2515, 4
        %v2518 = vshll.u32 %v2167, 16
        %v2520 = vrot.slane %v2518, 5
        %v2521 = vor.u32 %v2517, %v2520
        %v2522 = vrot.slane %v2521, 4
        %v2524 = vshll.u32 %v2168, 16
        %v2526 = vrot.slane %v2524, 5
        %v2527 = vsel %vm2175, %v2522, %v2526
        %v2528 = vshrl.u32 %v2168, 16
        %v2530 = vrot.slane %v2528, 4
        %v2531 = vor.u32 %v2530, %v2526
        %v2532 = vrot.slane %v2531, 4
        %v2534 = vshll.u32 %v2169, 16
        %v2536 = vrot.slane %v2534, 5
        %v2537 = vsel %vm2175, %v2532, %v2536
        %s2538 = scalar_lea.vmem %s3, 160
        %v2539 = vld [vmem:[%s2538] sm:$0xf]
        %v2540 = vld [vmem:[%s2538 + $0x4] sm:$0xf]
        %v2541 = vld [vmem:[%s2538 + $0x8] sm:$0xf]
        %v2542 = vld [vmem:[%s2538 + $0xc] sm:$0xf]
        %v2543 = vld [vmem:[%s2538 + $0x10] sm:$0xf]
        %v2544 = vld [vmem:[%s2538 + $0x14] sm:$0xf]
        %v2545 = vld [vmem:[%s2538 + $0x18] sm:$0xf]
        %v2546 = vld [vmem:[%s2538 + $0x1c] sm:$0xf]
        %v2547 = vunpack.c.l.b16 %v2527
        %v2548 = vunpack.c.l.b16 %v2537
        %v2549 = vpack.c.b16 %v2548, %v2547
        %v2558 = vunpack.c.l.b16 %v2539
        %v2559 = vunpack.c.l.b16 %v2540
        %v2560 = vunpack.c.l.b16 %v2541
        %v2561 = vunpack.c.l.b16 %v2542
        %v2562 = vunpack.c.l.b16 %v2543
        %v2563 = vunpack.c.l.b16 %v2544
        %v2564 = vunpack.c.l.b16 %v2545
        %v2565 = vunpack.c.l.b16 %v2546
        %v2566 = vpack.c.b16 %v2559, %v2558
        %v2567 = vpack.c.b16 %v2561, %v2560
        %v2568 = vpack.c.b16 %v2563, %v2562
        %v2569 = vpack.c.b16 %v2565, %v2564
        %v2575 = vsel %vm1490, %v2549, 0
        %2577 = vmatpush.bf16.msra.mxu0 0
        %2578 = vmatpush.bf16.msra.mxu0 0
        %2579 = vmatpush.bf16.msra.mxu0 0
        %2580 = vmatpush.bf16.msra.mxu0 0
        %2581 = vmatpush.bf16.msra.mxu0 %v2569
        %2582 = vmatpush.bf16.msra.mxu0 %v2568
        %2583 = vmatpush.bf16.msra.mxu0 %v2567
        %2584 = vmatpush.bf16.msra.mxu0 %v2566
        %2585 = vmatmul.bf16.gmra.mxu0 %v2429
        %v2586 = vpop.f32.mrf.mxu0
        %v2587 = vadd.f32 0.0, %v2586
        %v2588 = vpop.f32.mrf.mxu0
        %v2589 = vadd.f32 0.0, %v2588
        %2590 = vmatmul.bf16.gmra.mxu0 %v2432
        %v2591 = vpop.f32.mrf.mxu0
        %v2592 = vadd.f32 0.0, %v2591
        %v2593 = vpop.f32.mrf.mxu0
        %v2594 = vadd.f32 0.0, %v2593
        %2595 = vmatmul.bf16.gmra.mxu0 %v2435
        %v2596 = vpop.f32.mrf.mxu0
        %v2597 = vadd.f32 0.0, %v2596
        %v2598 = vpop.f32.mrf.mxu0
        %v2599 = vadd.f32 0.0, %v2598
        %2600 = vmatmul.bf16.gmra.mxu0 %v2438
        %v2601 = vpop.f32.mrf.mxu0
        %v2602 = vadd.f32 0.0, %v2601
        %v2603 = vpop.f32.mrf.mxu0
        %v2604 = vadd.f32 0.0, %v2603
        %2605 = vmatmul.bf16.gmra.mxu0 %v2441
        %v2606 = vpop.f32.mrf.mxu0
        %v2607 = vadd.f32 0.0, %v2606
        %v2608 = vpop.f32.mrf.mxu0
        %v2609 = vadd.f32 0.0, %v2608
        %2610 = vmatmul.bf16.gmra.mxu0 %v2444
        %v2611 = vpop.f32.mrf.mxu0
        %v2612 = vadd.f32 0.0, %v2611
        %v2613 = vpop.f32.mrf.mxu0
        %v2614 = vadd.f32 0.0, %v2613
        %2615 = vmatmul.bf16.gmra.mxu0 %v2447
        %v2616 = vpop.f32.mrf.mxu0
        %v2617 = vadd.f32 0.0, %v2616
        %v2618 = vpop.f32.mrf.mxu0
        %v2619 = vadd.f32 0.0, %v2618
        %2620 = vmatmul.bf16.gmra.mxu0 %v2575
        %v2621 = vpop.f32.mrf.mxu0
        %v2622 = vadd.f32 0.0, %v2621
        %v2623 = vpop.f32.mrf.mxu0
        %v2624 = vadd.f32 0.0, %v2623
        %2625 = vdwg.mxu0
        %v2626 = vadd.f32 %v2498, %v2587
        %v2627 = vadd.f32 %v2499, %v2589
        %v2628 = vadd.f32 %v2500, %v2592
        %v2629 = vadd.f32 %v2501, %v2594
        %v2630 = vadd.f32 %v2502, %v2597
        %v2631 = vadd.f32 %v2503, %v2599
        %v2632 = vadd.f32 %v2504, %v2602
        %v2633 = vadd.f32 %v2505, %v2604
        %v2634 = vadd.f32 %v2506, %v2607
        %v2635 = vadd.f32 %v2507, %v2609
        %v2636 = vadd.f32 %v2508, %v2612
        %v2637 = vadd.f32 %v2509, %v2614
        %v2638 = vadd.f32 %v2510, %v2617
        %v2639 = vadd.f32 %v2511, %v2619
        %v2640 = vadd.f32 %v2512, %v2622
        %v2641 = vadd.f32 %v2513, %v2624
        %v2643 = vshrl.u32 %v2170, 16
        %v2645 = vrot.slane %v2643, 4
        %v2646 = vshll.u32 %v2170, 16
        %v2648 = vrot.slane %v2646, 5
        %v2649 = vor.u32 %v2645, %v2648
        %v2650 = vrot.slane %v2649, 4
        %v2652 = vshll.u32 %v2171, 16
        %v2654 = vrot.slane %v2652, 5
        %v2655 = vsel %vm2175, %v2650, %v2654
        %v2656 = vshrl.u32 %v2171, 16
        %v2658 = vrot.slane %v2656, 4
        %v2659 = vor.u32 %v2658, %v2654
        %v2660 = vrot.slane %v2659, 4
        %v2662 = vshll.u32 %v2172, 16
        %v2664 = vrot.slane %v2662, 5
        %v2665 = vsel %vm2175, %v2660, %v2664
        %s2666 = scalar_lea.vmem %s3, 256
        %v2667 = vld [vmem:[%s2666] sm:$0xf]
        %v2668 = vld [vmem:[%s2666 + $0x4] sm:$0xf]
        %v2669 = vld [vmem:[%s2666 + $0x8] sm:$0xf]
        %v2670 = vld [vmem:[%s2666 + $0xc] sm:$0xf]
        %v2671 = vld [vmem:[%s2666 + $0x10] sm:$0xf]
        %v2672 = vld [vmem:[%s2666 + $0x14] sm:$0xf]
        %v2673 = vld [vmem:[%s2666 + $0x18] sm:$0xf]
        %v2674 = vld [vmem:[%s2666 + $0x1c] sm:$0xf]
        %v2675 = vunpack.c.l.b16 %v2655
        %v2676 = vunpack.c.l.b16 %v2665
        %v2677 = vpack.c.b16 %v2676, %v2675
        %v2686 = vunpack.c.l.b16 %v2667
        %v2687 = vunpack.c.l.b16 %v2668
        %v2688 = vunpack.c.l.b16 %v2669
        %v2689 = vunpack.c.l.b16 %v2670
        %v2690 = vunpack.c.l.b16 %v2671
        %v2691 = vunpack.c.l.b16 %v2672
        %v2692 = vunpack.c.l.b16 %v2673
        %v2693 = vunpack.c.l.b16 %v2674
        %v2694 = vpack.c.b16 %v2687, %v2686
        %v2695 = vpack.c.b16 %v2689, %v2688
        %v2696 = vpack.c.b16 %v2691, %v2690
        %v2697 = vpack.c.b16 %v2693, %v2692
        %v2703 = vsel %vm1490, %v2677, 0
        %2705 = vmatpush.bf16.msra.mxu0 0
        %2706 = vmatpush.bf16.msra.mxu0 0
        %2707 = vmatpush.bf16.msra.mxu0 0
        %2708 = vmatpush.bf16.msra.mxu0 0
        %2709 = vmatpush.bf16.msra.mxu0 %v2697
        %2710 = vmatpush.bf16.msra.mxu0 %v2696
        %2711 = vmatpush.bf16.msra.mxu0 %v2695
        %2712 = vmatpush.bf16.msra.mxu0 %v2694
        %2713 = vmatmul.bf16.gmra.mxu0 %v2432
        %v2714 = vpop.f32.mrf.mxu0
        %v2715 = vadd.f32 0.0, %v2714
        %v2716 = vpop.f32.mrf.mxu0
        %v2717 = vadd.f32 0.0, %v2716
        %2718 = vmatmul.bf16.gmra.mxu0 %v2435
        %v2719 = vpop.f32.mrf.mxu0
        %v2720 = vadd.f32 0.0, %v2719
        %v2721 = vpop.f32.mrf.mxu0
        %v2722 = vadd.f32 0.0, %v2721
        %2723 = vmatmul.bf16.gmra.mxu0 %v2438
        %v2724 = vpop.f32.mrf.mxu0
        %v2725 = vadd.f32 0.0, %v2724
        %v2726 = vpop.f32.mrf.mxu0
        %v2727 = vadd.f32 0.0, %v2726
        %2728 = vmatmul.bf16.gmra.mxu0 %v2441
        %v2729 = vpop.f32.mrf.mxu0
        %v2730 = vadd.f32 0.0, %v2729
        %v2731 = vpop.f32.mrf.mxu0
        %v2732 = vadd.f32 0.0, %v2731
        %2733 = vmatmul.bf16.gmra.mxu0 %v2444
        %v2734 = vpop.f32.mrf.mxu0
        %v2735 = vadd.f32 0.0, %v2734
        %v2736 = vpop.f32.mrf.mxu0
        %v2737 = vadd.f32 0.0, %v2736
        %2738 = vmatmul.bf16.gmra.mxu0 %v2447
        %v2739 = vpop.f32.mrf.mxu0
        %v2740 = vadd.f32 0.0, %v2739
        %v2741 = vpop.f32.mrf.mxu0
        %v2742 = vadd.f32 0.0, %v2741
        %2743 = vmatmul.bf16.gmra.mxu0 %v2575
        %v2744 = vpop.f32.mrf.mxu0
        %v2745 = vadd.f32 0.0, %v2744
        %v2746 = vpop.f32.mrf.mxu0
        %v2747 = vadd.f32 0.0, %v2746
        %2748 = vmatmul.bf16.gmra.mxu0 %v2703
        %v2749 = vpop.f32.mrf.mxu0
        %v2750 = vadd.f32 0.0, %v2749
        %v2751 = vpop.f32.mrf.mxu0
        %v2752 = vadd.f32 0.0, %v2751
        %2753 = vdwg.mxu0
        %v2754 = vadd.f32 %v2626, %v2715
        %v2755 = vadd.f32 %v2627, %v2717
        %v2756 = vadd.f32 %v2628, %v2720
        %v2757 = vadd.f32 %v2629, %v2722
        %v2758 = vadd.f32 %v2630, %v2725
        %v2759 = vadd.f32 %v2631, %v2727
        %v2760 = vadd.f32 %v2632, %v2730
        %v2761 = vadd.f32 %v2633, %v2732
        %v2762 = vadd.f32 %v2634, %v2735
        %v2763 = vadd.f32 %v2635, %v2737
        %v2764 = vadd.f32 %v2636, %v2740
        %v2765 = vadd.f32 %v2637, %v2742
        %v2766 = vadd.f32 %v2638, %v2745
        %v2767 = vadd.f32 %v2639, %v2747
        %v2768 = vadd.f32 %v2640, %v2750
        %v2769 = vadd.f32 %v2641, %v2752
        %v2770 = vld [vmem:[%s4] sm:$0x1]
        %v2772 = vperm.slane %v2770, 0
        %v2774 = vadd.f32 %v2754, %v2772
        %v2775 = vadd.f32 %v2755, %v2772
        %v2776 = vadd.f32 %v2756, %v2772
        %v2777 = vadd.f32 %v2757, %v2772
        %v2778 = vadd.f32 %v2758, %v2772
        %v2779 = vadd.f32 %v2759, %v2772
        %v2780 = vadd.f32 %v2760, %v2772
        %v2781 = vadd.f32 %v2761, %v2772
        %v2782 = vadd.f32 %v2762, %v2772
        %v2783 = vadd.f32 %v2763, %v2772
        %v2784 = vadd.f32 %v2764, %v2772
        %v2785 = vadd.f32 %v2765, %v2772
        %v2786 = vadd.f32 %v2766, %v2772
        %v2787 = vadd.f32 %v2767, %v2772
        %v2788 = vadd.f32 %v2768, %v2772
        %v2789 = vadd.f32 %v2769, %v2772
        %v2790 = vmax.f32 %v2774, 0.0
        %v2791 = vmax.f32 %v2775, 0.0
        %v2792 = vmax.f32 %v2776, 0.0
        %v2793 = vmax.f32 %v2777, 0.0
        %v2794 = vmax.f32 %v2778, 0.0
        %v2795 = vmax.f32 %v2779, 0.0
        %v2796 = vmax.f32 %v2780, 0.0
        %v2797 = vmax.f32 %v2781, 0.0
        %v2798 = vmax.f32 %v2782, 0.0
        %v2799 = vmax.f32 %v2783, 0.0
        %v2800 = vmax.f32 %v2784, 0.0
        %v2801 = vmax.f32 %v2785, 0.0
        %v2802 = vmax.f32 %v2786, 0.0
        %v2803 = vmax.f32 %v2787, 0.0
        %v2804 = vmax.f32 %v2788, 0.0
        %v2805 = vmax.f32 %v2789, 0.0
        %v2806 = vpack.c.bf16 %v2791, %v2790
        %v2807 = vpack.c.bf16 %v2793, %v2792
        %v2808 = vpack.c.bf16 %v2795, %v2794
        %v2809 = vpack.c.bf16 %v2797, %v2796
        %v2810 = vpack.c.bf16 %v2799, %v2798
        %v2811 = vpack.c.bf16 %v2801, %v2800
        %v2812 = vpack.c.bf16 %v2803, %v2802
        %v2813 = vpack.c.bf16 %v2805, %v2804
        %v2814 = vld [vmem:[%s5] sm:$0x1]
        %v2815 = vld [vmem:[#allocation3] sm:$0x1]
        %2817 = vset.pattern.permute.xlu0 0
        %2818 = vperm.xlu0 %2817, %v2815
        %v2819 = vpop.permute.xlu0 %2818
        %v2821 = vperm.slane %v2819, 0
        %v2823 = vsel %vm1490, %v2814, 0
        %v2826 = vsel %vm1490, %v2806, 0
        %v2829 = vsel %vm1490, %v2807, 0
        %v2832 = vsel %vm1490, %v2808, 0
        %v2835 = vsel %vm1490, %v2809, 0
        %v2838 = vsel %vm1490, %v2810, 0
        %v2841 = vsel %vm1490, %v2811, 0
        %v2844 = vsel %vm1490, %v2812, 0
        %v2847 = vsel %vm1490, %v2813, 0
        %2849 = vmatpush.bf16.xpose.msra.mxu0 %v2847
        %2850 = vmatpush.bf16.xpose.msra.mxu0 %v2844
        %2851 = vmatpush.bf16.xpose.msra.mxu0 %v2841
        %2852 = vmatpush.bf16.xpose.msra.mxu0 %v2838
        %2853 = vmatpush.bf16.xpose.msra.mxu0 %v2835
        %2854 = vmatpush.bf16.xpose.msra.mxu0 %v2832
        %2855 = vmatpush.bf16.xpose.msra.mxu0 %v2829
        %2856 = vmatpush.bf16.xpose.msra.mxu0 %v2826
        %2857 = vmatmul.bf16.gmra.mxu0 %v2823
        %v2858 = vpop.f32.mrf.mxu0
        %v2859 = vadd.f32 %v2821, %v2858
        %v2860 = vpop.f32.mrf.mxu0
        %2861 = vdwg.mxu0
        %2862 = vst [vmem:[%s296] sm:$0x1] %v2859
        %s2863 = sand.u32 %s199, 1
        %s2864 = scalar_lea.sflag [#allocation5], %s2863
        %s2865 = sand.u32 %s199, 1
        %s2866 = scalar_lea.vmem [#allocation4], %s2865
        // Predicated region
        $region57: #{tpu_custom_call.1} parent=47 // pred_check
          %p2867 = pneg %p209
        $region58: #{tpu_custom_call.1} parent=47 // pred_check_branch
          %2869 = sbr.rel (%p2867) target = $region60
        $region59: #{tpu_custom_call.1} parent=47 // pred_region
          %2871 = vsyncadd %s2864, 0
          %s2872 = smul.addr %s27, 2
          %s2873 = sadd.s32 %s28, %s2872
          %s2874 = scalar_lea.hbm %s7, %s2873
          %s2876 = sshll.u32 %s2866, 4
          %s2877 = int_to_ptr.vmem [resolvable:$true] %s2876
          %s2878 = sshll.u32 %s2874, 4
          %s2879 = int_to_ptr.hbm [resolvable:$true] %s2878
          %2881 = dma.vmem_to_hbm [thread:$0]  %s2877, 16, %s2879, %s2864
        $region60: #{tpu_custom_call.1} parent=47 // pred_fallthru
          _
      $region48: #{tpu_custom_call.1} parent=5 // pred_fallthru
        _
      %p2882 = scmp.le.s32.totalorder 2, %s18
      // Predicated region
      $region61: #{tpu_custom_call.1} parent=5 // pred_check
        %p2883 = pneg %p2882
      $region62: #{tpu_custom_call.1} parent=5 // pred_check_branch
        %2885 = sbr.rel (%p2883) target = $region64
      $region63: #{tpu_custom_call.1} parent=5 // pred_region
        %s2886 = ssub.s32 %s18, 2
        // Predicated region
        $region65: #{tpu_custom_call.1} parent=63 // pred_check
          %p2887 = pneg %p215
        $region66: #{tpu_custom_call.1} parent=63 // pred_check_branch
          %2889 = sbr.rel (%p2887) target = $region68
        $region67: #{tpu_custom_call.1} parent=63 // pred_region
          %s2890 = sand.u32 %s200, 1
          %s2891 = scalar_lea.sflag [#allocation5], %s2890
          %s2892 = sand.u32 %s200, 1
          %s2893 = scalar_lea.vmem [#allocation4], %s2892
          %2895 = dma.done %s2891, 16
        $region68: #{tpu_custom_call.1} parent=63 // pred_fallthru
          _
      $region64: #{tpu_custom_call.1} parent=5 // pred_fallthru
        _
    $region6: #{tpu_custom_call.1} parent=1 // loop_footer
      %s22 = sadd.s32 1, %s18
    $region7: #{tpu_custom_call.1} parent=1 // loop_footer_branch
      %17 = sbr.rel target = $region3
    $region8: #{tpu_custom_call.1} parent=1 // loop_exit
      _
    %2896 = vsyncpa [#allocation5], 1
    %s2897 = scalar_lea.sflag [#allocation5], 1
    %2898 = vsyncpa %s2897, 1

</llo_original>
